<compile_context>
chip_gen: v7x
topology: tpu7x:2x2x1
jax: 0.10.0
libtpu: 0.0.40
codegen_flags: <defaults>
</compile_context>

<pallas_src>
import functools

import jax
import jax.numpy as jnp
import numpy as np
from jax.experimental import pallas as pl
from jax.experimental.pallas import tpu as pltpu

EPS = 1e-5


# ----------------------------- kernel helpers --------------------------------
def _conv_taps(xp, stride, h_out, w_out):
    """The 9 shifted (h_out*w_out, C) tap slabs of a padded (Hp, Wp, C) image."""
    c = xp.shape[-1]
    taps = []
    for kh in range(3):
        for kw in range(3):
            if stride == 1:
                t = xp[kh:kh + h_out, kw:kw + w_out, :]
            else:
                t = xp[kh:kh + (h_out - 1) * stride + 1:stride,
                       kw:kw + (w_out - 1) * stride + 1:stride, :]
            taps.append(t.reshape(h_out * w_out, c))
    return taps


def _sum_sumsq(y):
    """(2, C) slab: row 0 = sum over rows, row 1 = sum of squares (one pass)."""
    return jnp.concatenate([jnp.sum(y, axis=0, keepdims=True),
                            jnp.sum(y * y, axis=0, keepdims=True)], axis=0)


# ------------------------------- kernels --------------------------------------
def _conv1_shortcut_kernel(xp_ref, w1_ref, wsc_ref,
                           y1_ref, ysc_ref, s1_ref, ssc_ref,
                           *, stride, h_out, w_out):
    """conv1 (3x3/stride, pad=1) and shortcut conv (1x1/stride) for one image."""
    xp = xp_ref[...]                                    # (H+2, W+2, Cin) bf16

    # conv1 as a single im2col matmul (K = 9*Cin).  Bias omitted: it is
    # cancelled exactly by the training-mode BN mean subtraction.
    patches = jnp.concatenate(_conv_taps(xp, stride, h_out, w_out), axis=-1)
    y1 = jnp.dot(patches, w1_ref[...], preferred_element_type=jnp.float32)
    y1_ref[...] = y1
    s1_ref[...] = _sum_sumsq(y1)

    # 1x1/stride shortcut conv over the un-padded centre of xp.
    if stride == 1:
        xs = xp[1:1 + h_out, 1:1 + w_out, :]
    else:
        xs = xp[1:1 + (h_out - 1) * stride + 1:stride,
                1:1 + (w_out - 1) * stride + 1:stride, :]
    xs = xs.reshape(h_out * w_out, xp.shape[-1])
    ysc = jnp.dot(xs, wsc_ref[...], preferred_element_type=jnp.float32)
    ysc_ref[...] = ysc
    ssc_ref[...] = _sum_sumsq(ysc)


def _bn_relu_conv2_kernel(y1_ref, sc1_ref, sh1_ref, w2_ref,
                          y2_ref, s2_ref, pad_ref, *, h_out, w_out):
    """bn1 (folded scale/shift) -> relu -> conv2 (3x3, stride 1, pad 1)."""
    c = y1_ref.shape[-1]
    a = jnp.maximum(y1_ref[...] * sc1_ref[...] + sh1_ref[...], 0.0)   # f32
    a = a.astype(pad_ref.dtype).reshape(h_out, w_out, c)              # bf16

    # Zero only the 1-pixel halo of the padded scratch, then write the interior.
    zrow = jnp.zeros((1, w_out + 2, c), pad_ref.dtype)
    zcol = jnp.zeros((h_out, 1, c), pad_ref.dtype)
    pad_ref[0:1, :, :] = zrow
    pad_ref[h_out + 1:h_out + 2, :, :] = zrow
    pad_ref[1:1 + h_out, 0:1, :] = zcol
    pad_ref[1:1 + h_out, w_out + 1:w_out + 2, :] = zcol
    pad_ref[1:1 + h_out, 1:1 + w_out, :] = a

    xp = pad_ref[...]                                   # (H+2, W+2, C) bf16
    patches = jnp.concatenate(_conv_taps(xp, 1, h_out, w_out), axis=-1)
    y2 = jnp.dot(patches, w2_ref[...], preferred_element_type=jnp.float32)
    y2_ref[...] = y2
    s2_ref[...] = _sum_sumsq(y2)


def _bn_add_kernel(y2_ref, ysc_ref, sc2_ref, sh2_ref, scs_ref, shs_ref,
                   out_ref, *, h_out, w_out):
    """out = bn2(y2) + bn_sc(ysc), stored lane-dense as (Hout, Wout*Cout)."""
    c = y2_ref.shape[-1]
    r = (y2_ref[...] * sc2_ref[...] + sh2_ref[...]
         + ysc_ref[...] * scs_ref[...] + shs_ref[...])
    out_ref[...] = r.reshape(h_out, w_out * c)


# ------------------------------- wrapper --------------------------------------
def _bn_scale_shift(stats, gamma, beta, count):
    """Fold global training-mode BN statistics into per-channel scale/shift."""
    s = jnp.sum(stats[:, 0, :], axis=0)
    ss = jnp.sum(stats[:, 1, :], axis=0)
    mean = s / count
    var = ss / count - mean * mean                      # biased variance
    inv = jax.lax.rsqrt(var + EPS)
    scale = gamma * inv
    shift = beta - mean * scale
    return (scale.reshape(1, -1).astype(jnp.float32),
            shift.reshape(1, -1).astype(jnp.float32))


def resblk_forward(x_nchw, params, stride=1):
    n, c_in, h, w = x_nchw.shape
    c_out = params["w1"].shape[0]
    h_out = (h - 1) // stride + 1
    w_out = (w - 1) // stride + 1
    rows = h_out * w_out
    count = n * rows

    # NHWC + 1px spatial pad; bf16 activations feed the MXU (f32 accumulation).
    x = jnp.transpose(x_nchw, (0, 2, 3, 1))
    x_pad = jnp.pad(x, ((0, 0), (1, 1), (1, 1), (0, 0))).astype(jnp.bfloat16)

    # Conv weights as (K, Cout) matmul operands in bf16 (im2col ordering
    # kh-major, kw, cin-minor matches the in-kernel tap concatenation).
    w1r = jnp.transpose(params["w1"], (2, 3, 1, 0)).reshape(9 * c_in, c_out)
    w1r = w1r.astype(jnp.bfloat16)
    w2r = jnp.transpose(params["w2"], (2, 3, 1, 0)).reshape(9 * c_out, c_out)
    w2r = w2r.astype(jnp.bfloat16)
    wscr = params["we"][:, :, 0, 0].T.astype(jnp.bfloat16)

    cparams = pltpu.CompilerParams(
        dimension_semantics=("parallel",),              # megacore-friendly axis
        vmem_limit_bytes=32 * 1024 * 1024)

    img = lambda i: (i, 0, 0)                           # per-image block
    rep2 = lambda i: (0, 0)                             # resident full block

    # --- pass 1: conv1 + shortcut conv + per-image partial BN statistics -----
    y1, ysc, s1, ssc = pl.pallas_call(
        functools.partial(_conv1_shortcut_kernel,
                          stride=stride, h_out=h_out, w_out=w_out),
        grid=(n,),
        in_specs=[
            pl.BlockSpec((None, h + 2, w + 2, c_in), lambda i: (i, 0, 0, 0)),
            pl.BlockSpec((9 * c_in, c_out), rep2),
            pl.BlockSpec((c_in, c_out), rep2),
        ],
        out_specs=(
            pl.BlockSpec((None, rows, c_out), img),
            pl.BlockSpec((None, rows, c_out), img),
            pl.BlockSpec((None, 2, c_out), img),
            pl.BlockSpec((None, 2, c_out), img),
        ),
        out_shape=(
            jax.ShapeDtypeStruct((n, rows, c_out), jnp.float32),
            jax.ShapeDtypeStruct((n, rows, c_out), jnp.float32),
            jax.ShapeDtypeStruct((n, 2, c_out), jnp.float32),
            jax.ShapeDtypeStruct((n, 2, c_out), jnp.float32),
        ),
        compiler_params=cparams,
    )(x_pad, w1r, wscr)

    # Global (over N*H*W) BN coefficients -- tiny per-channel math.
    scale1, shift1 = _bn_scale_shift(s1, params["g1"], params["bb1"], count)
    scale_sc, shift_sc = _bn_scale_shift(ssc, params["ge"], params["bbe"], count)

    # --- pass 2: bn1 + relu + conv2 + per-image partial BN statistics --------
    y2, s2 = pl.pallas_call(
        functools.partial(_bn_relu_conv2_kernel, h_out=h_out, w_out=w_out),
        grid=(n,),
        in_specs=[
            pl.BlockSpec((None, rows, c_out), img),
            pl.BlockSpec((1, c_out), rep2),
            pl.BlockSpec((1, c_out), rep2),
            pl.BlockSpec((9 * c_out, c_out), rep2),
        ],
        out_specs=(
            pl.BlockSpec((None, rows, c_out), img),
            pl.BlockSpec((None, 2, c_out), img),
        ),
        out_shape=(
            jax.ShapeDtypeStruct((n, rows, c_out), jnp.float32),
            jax.ShapeDtypeStruct((n, 2, c_out), jnp.float32),
        ),
        scratch_shapes=[pltpu.VMEM((h_out + 2, w_out + 2, c_out), jnp.bfloat16)],
        compiler_params=cparams,
    )(y1, scale1, shift1, w2r)

    scale2, shift2 = _bn_scale_shift(s2, params["g2"], params["bb2"], count)

    # --- pass 3: bn2 + bn_shortcut + residual add (lane-dense output) --------
    out2d = pl.pallas_call(
        functools.partial(_bn_add_kernel, h_out=h_out, w_out=w_out),
        grid=(n,),
        in_specs=[
            pl.BlockSpec((None, rows, c_out), img),
            pl.BlockSpec((None, rows, c_out), img),
            pl.BlockSpec((1, c_out), rep2),
            pl.BlockSpec((1, c_out), rep2),
            pl.BlockSpec((1, c_out), rep2),
            pl.BlockSpec((1, c_out), rep2),
        ],
        out_specs=pl.BlockSpec((None, h_out, w_out * c_out), img),
        out_shape=jax.ShapeDtypeStruct((n, h_out, w_out * c_out), jnp.float32),
        compiler_params=cparams,
    )(y2, ysc, scale2, shift2, scale_sc, shift_sc)

    out_nhwc = out2d.reshape(n, h_out, w_out, c_out)
    return jnp.transpose(out_nhwc, (0, 3, 1, 2))        # back to NCHW


# ------------------------------ reference -------------------------------------
def resblk_reference(x, p, stride=1):
    """Pure-JAX reference mirroring the PyTorch forward (training-mode BN)."""
    def conv(x, w, b, s, pad):
        y = jax.lax.conv_general_dilated(
            x, w, window_strides=(s, s), padding=[(pad, pad), (pad, pad)],
            dimension_numbers=("NCHW", "OIHW", "NCHW"))
        return y + b[None, :, None, None]

    def bn(y, g, b):
        mean = y.mean(axis=(0, 2, 3), keepdims=True)
        var = ((y - mean) ** 2).mean(axis=(0, 2, 3), keepdims=True)
        return ((y - mean) * jax.lax.rsqrt(var + EPS) * g[None, :, None, None]
                + b[None, :, None, None])

    out = jax.nn.relu(bn(conv(x, p["w1"], p["b1"], stride, 1), p["g1"], p["bb1"]))
    out = bn(conv(out, p["w2"], p["b2"], 1, 1), p["g2"], p["bb2"])
    sc = bn(conv(x, p["we"], p["be"], stride, 0), p["ge"], p["bbe"])
    return sc + out


if __name__ == "__main__":
    key = jax.random.PRNGKey(0)
    ch_in, ch_out, stride = 4, 8, 1
    n, h, w = 2, 16, 16
    keys = jax.random.split(key, 8)

    def kaiming(k, shape):                      # kaiming_normal_, mode='fan_out'
        fan_out = shape[0] * shape[2] * shape[3]
        return jax.random.normal(k, shape, jnp.float32) * jnp.sqrt(2.0 / fan_out)

    def conv_bias(k, c_out_, fan_in):           # default Conv2d bias init
        bound = 1.0 / np.sqrt(fan_in)
        return jax.random.uniform(k, (c_out_,), jnp.float32, -bound, bound)

    params = {
        "w1": kaiming(keys[0], (ch_out, ch_in, 3, 3)),
        "b1": conv_bias(keys[1], ch_out, ch_in * 9),
        "g1": jnp.ones((ch_out,), jnp.float32),
        "bb1": jnp.zeros((ch_out,), jnp.float32),
        "w2": kaiming(keys[2], (ch_out, ch_out, 3, 3)),
        "b2": conv_bias(keys[3], ch_out, ch_out * 9),
        "g2": jnp.ones((ch_out,), jnp.float32),
        "bb2": jnp.zeros((ch_out,), jnp.float32),
        "we": kaiming(keys[4], (ch_out, ch_in, 1, 1)),
        "be": conv_bias(keys[5], ch_out, ch_in),
        "ge": jnp.ones((ch_out,), jnp.float32),
        "bbe": jnp.zeros((ch_out,), jnp.float32),
    }

    x = jax.random.normal(keys[6], (n, ch_in, h, w), jnp.float32)

    out = jax.block_until_ready(resblk_forward(x, params, stride=stride))
    ref = jax.block_until_ready(resblk_reference(x, params, stride=stride))

    assert out.shape == ref.shape == (n, ch_out, h, w)
    # Kernel matmuls run with bf16 MXU operands (f32 accumulation), reference
    # is pure f32 -- allow a bf16-sized tolerance.
    max_diff = float(jnp.max(jnp.abs(out - ref)))
    assert max_diff < 1e-1, f"mismatch vs reference: max_diff={max_diff}"
    print("KERNEL_OK")
</pallas_src>

<mosaic_0001>
module attributes {stable_mosaic.version = 11 : i64} {
  func.func @_conv1_shortcut_kernel(%arg0: i32, %arg1: memref<1x18x18x4xbf16, #tpu.memory_space<vmem>>, %arg2: memref<36x8xbf16, #tpu.memory_space<vmem>>, %arg3: memref<4x8xbf16, #tpu.memory_space<vmem>>, %arg4: memref<1x256x8xf32, #tpu.memory_space<vmem>>, %arg5: memref<1x256x8xf32, #tpu.memory_space<vmem>>, %arg6: memref<1x2x8xf32, #tpu.memory_space<vmem>>, %arg7: memref<1x2x8xf32, #tpu.memory_space<vmem>>) attributes {dimension_semantics = [#tpu.dimension_semantics<parallel>], iteration_bounds = array<i64: 2>, scalar_prefetch = 0 : i64, scratch_operands = 0 : i64, tpu.core_type = #tpu.core_type<tc>, window_params = [{transform_indices = @transform_0, window_bounds = array<i64: 1, 18, 18, 4>}, {pipeline_mode = #tpu.pipeline_mode<synchronous>, transform_indices = @transform_1, window_bounds = array<i64: 36, 8>}, {pipeline_mode = #tpu.pipeline_mode<synchronous>, transform_indices = @transform_2, window_bounds = array<i64: 4, 8>}, {transform_indices = @transform_3, window_bounds = array<i64: 1, 256, 8>}, {transform_indices = @transform_4, window_bounds = array<i64: 1, 256, 8>}, {transform_indices = @transform_5, window_bounds = array<i64: 1, 2, 8>}, {transform_indices = @transform_6, window_bounds = array<i64: 1, 2, 8>}]} {
    %c0 = arith.constant 0 : index
    %c0_0 = arith.constant 0 : index
    %c0_1 = arith.constant 0 : index
    %c0_2 = arith.constant 0 : index
    %0 = vector.load %arg1[%c0, %c0_0, %c0_1, %c0_2] : memref<1x18x18x4xbf16, #tpu.memory_space<vmem>>, vector<1x18x18x4xbf16>
    %1 = vector.shape_cast %0 : vector<1x18x18x4xbf16> to vector<18x18x4xbf16>
    %2 = vector.extract_strided_slice %1 {offsets = [0, 0, 0], sizes = [16, 16, 4], strides = [1, 1, 1]} : vector<18x18x4xbf16> to vector<16x16x4xbf16>
    %3 = vector.shape_cast %2 : vector<16x16x4xbf16> to vector<256x4xbf16>
    %4 = vector.extract_strided_slice %1 {offsets = [0, 1, 0], sizes = [16, 16, 4], strides = [1, 1, 1]} : vector<18x18x4xbf16> to vector<16x16x4xbf16>
    %5 = vector.shape_cast %4 : vector<16x16x4xbf16> to vector<256x4xbf16>
    %6 = vector.extract_strided_slice %1 {offsets = [0, 2, 0], sizes = [16, 16, 4], strides = [1, 1, 1]} : vector<18x18x4xbf16> to vector<16x16x4xbf16>
    %7 = vector.shape_cast %6 : vector<16x16x4xbf16> to vector<256x4xbf16>
    %8 = vector.extract_strided_slice %1 {offsets = [1, 0, 0], sizes = [16, 16, 4], strides = [1, 1, 1]} : vector<18x18x4xbf16> to vector<16x16x4xbf16>
    %9 = vector.shape_cast %8 : vector<16x16x4xbf16> to vector<256x4xbf16>
    %10 = vector.extract_strided_slice %1 {offsets = [1, 1, 0], sizes = [16, 16, 4], strides = [1, 1, 1]} : vector<18x18x4xbf16> to vector<16x16x4xbf16>
    %11 = vector.shape_cast %10 : vector<16x16x4xbf16> to vector<256x4xbf16>
    %12 = vector.extract_strided_slice %1 {offsets = [1, 2, 0], sizes = [16, 16, 4], strides = [1, 1, 1]} : vector<18x18x4xbf16> to vector<16x16x4xbf16>
    %13 = vector.shape_cast %12 : vector<16x16x4xbf16> to vector<256x4xbf16>
    %14 = vector.extract_strided_slice %1 {offsets = [2, 0, 0], sizes = [16, 16, 4], strides = [1, 1, 1]} : vector<18x18x4xbf16> to vector<16x16x4xbf16>
    %15 = vector.shape_cast %14 : vector<16x16x4xbf16> to vector<256x4xbf16>
    %16 = vector.extract_strided_slice %1 {offsets = [2, 1, 0], sizes = [16, 16, 4], strides = [1, 1, 1]} : vector<18x18x4xbf16> to vector<16x16x4xbf16>
    %17 = vector.shape_cast %16 : vector<16x16x4xbf16> to vector<256x4xbf16>
    %18 = vector.extract_strided_slice %1 {offsets = [2, 2, 0], sizes = [16, 16, 4], strides = [1, 1, 1]} : vector<18x18x4xbf16> to vector<16x16x4xbf16>
    %19 = vector.shape_cast %18 : vector<16x16x4xbf16> to vector<256x4xbf16>
    %20 = tpu.concatenate %3, %5, %7, %9, %11, %13, %15, %17, %19 in 1 : vector<256x4xbf16>, vector<256x4xbf16>, vector<256x4xbf16>, vector<256x4xbf16>, vector<256x4xbf16>, vector<256x4xbf16>, vector<256x4xbf16>, vector<256x4xbf16>, vector<256x4xbf16> -> vector<256x36xbf16>
    %c0_3 = arith.constant 0 : index
    %c0_4 = arith.constant 0 : index
    %21 = vector.load %arg2[%c0_3, %c0_4] : memref<36x8xbf16, #tpu.memory_space<vmem>>, vector<36x8xbf16>
    %cst = arith.constant dense<0.000000e+00> : vector<256x8xf32>
    %22 = tpu.matmul %20, %21, %cst {dimension_numbers = #tpu.dot_dimension_numbers<[1], [0], [0], [1], [0, 0, 1, 1], [], []>} : vector<256x36xbf16>, vector<36x8xbf16>, vector<256x8xf32> -> vector<256x8xf32>
    %c0_5 = arith.constant 0 : index
    %c0_6 = arith.constant 0 : index
    %c0_7 = arith.constant 0 : index
    %23 = vector.load %arg4[%c0_5, %c0_6, %c0_7] : memref<1x256x8xf32, #tpu.memory_space<vmem>>, vector<1x256x8xf32>
    %24 = vector.shape_cast %23 : vector<1x256x8xf32> to vector<256x8xf32>
    %25 = vector.shape_cast %22 : vector<256x8xf32> to vector<1x256x8xf32>
    tpu.vector_store %arg4[%c0_5, %c0_6, %c0_7], %25 {strides = array<i32>} : memref<1x256x8xf32, #tpu.memory_space<vmem>>, vector<1x256x8xf32>,
    %cst_8 = arith.constant dense<0.000000e+00> : vector<8xf32>
    %26 = vector.multi_reduction <add>, %22, %cst_8 [0] : vector<256x8xf32> to vector<8xf32>
    %27 = vector.shape_cast %26 : vector<8xf32> to vector<1x8xf32>
    %28 = arith.mulf %22, %22 : vector<256x8xf32>
    %cst_9 = arith.constant dense<0.000000e+00> : vector<8xf32>
    %29 = vector.multi_reduction <add>, %28, %cst_9 [0] : vector<256x8xf32> to vector<8xf32>
    %30 = vector.shape_cast %29 : vector<8xf32> to vector<1x8xf32>
    %31 = tpu.concatenate %27, %30 in 0 : vector<1x8xf32>, vector<1x8xf32> -> vector<2x8xf32>
    %c0_10 = arith.constant 0 : index
    %c0_11 = arith.constant 0 : index
    %c0_12 = arith.constant 0 : index
    %32 = vector.load %arg6[%c0_10, %c0_11, %c0_12] : memref<1x2x8xf32, #tpu.memory_space<vmem>>, vector<1x2x8xf32>
    %33 = vector.shape_cast %32 : vector<1x2x8xf32> to vector<2x8xf32>
    %34 = vector.shape_cast %31 : vector<2x8xf32> to vector<1x2x8xf32>
    tpu.vector_store %arg6[%c0_10, %c0_11, %c0_12], %34 {strides = array<i32>} : memref<1x2x8xf32, #tpu.memory_space<vmem>>, vector<1x2x8xf32>,
    %35 = vector.extract_strided_slice %1 {offsets = [1, 1, 0], sizes = [16, 16, 4], strides = [1, 1, 1]} : vector<18x18x4xbf16> to vector<16x16x4xbf16>
    %36 = vector.shape_cast %35 : vector<16x16x4xbf16> to vector<256x4xbf16>
    %c0_13 = arith.constant 0 : index
    %c0_14 = arith.constant 0 : index
    %37 = vector.load %arg3[%c0_13, %c0_14] : memref<4x8xbf16, #tpu.memory_space<vmem>>, vector<4x8xbf16>
    %cst_15 = arith.constant dense<0.000000e+00> : vector<256x8xf32>
    %38 = tpu.matmul %36, %37, %cst_15 {dimension_numbers = #tpu.dot_dimension_numbers<[1], [0], [0], [1], [0, 0, 1, 1], [], []>} : vector<256x4xbf16>, vector<4x8xbf16>, vector<256x8xf32> -> vector<256x8xf32>
    %c0_16 = arith.constant 0 : index
    %c0_17 = arith.constant 0 : index
    %c0_18 = arith.constant 0 : index
    %39 = vector.load %arg5[%c0_16, %c0_17, %c0_18] : memref<1x256x8xf32, #tpu.memory_space<vmem>>, vector<1x256x8xf32>
    %40 = vector.shape_cast %39 : vector<1x256x8xf32> to vector<256x8xf32>
    %41 = vector.shape_cast %38 : vector<256x8xf32> to vector<1x256x8xf32>
    tpu.vector_store %arg5[%c0_16, %c0_17, %c0_18], %41 {strides = array<i32>} : memref<1x256x8xf32, #tpu.memory_space<vmem>>, vector<1x256x8xf32>,
    %cst_19 = arith.constant dense<0.000000e+00> : vector<8xf32>
    %42 = vector.multi_reduction <add>, %38, %cst_19 [0] : vector<256x8xf32> to vector<8xf32>
    %43 = vector.shape_cast %42 : vector<8xf32> to vector<1x8xf32>
    %44 = arith.mulf %38, %38 : vector<256x8xf32>
    %cst_20 = arith.constant dense<0.000000e+00> : vector<8xf32>
    %45 = vector.multi_reduction <add>, %44, %cst_20 [0] : vector<256x8xf32> to vector<8xf32>
    %46 = vector.shape_cast %45 : vector<8xf32> to vector<1x8xf32>
    %47 = tpu.concatenate %43, %46 in 0 : vector<1x8xf32>, vector<1x8xf32> -> vector<2x8xf32>
    %c0_21 = arith.constant 0 : index
    %c0_22 = arith.constant 0 : index
    %c0_23 = arith.constant 0 : index
    %48 = vector.load %arg7[%c0_21, %c0_22, %c0_23] : memref<1x2x8xf32, #tpu.memory_space<vmem>>, vector<1x2x8xf32>
    %49 = vector.shape_cast %48 : vector<1x2x8xf32> to vector<2x8xf32>
    %50 = vector.shape_cast %47 : vector<2x8xf32> to vector<1x2x8xf32>
    tpu.vector_store %arg7[%c0_21, %c0_22, %c0_23], %50 {strides = array<i32>} : memref<1x2x8xf32, #tpu.memory_space<vmem>>, vector<1x2x8xf32>,
    return
  }
  func.func @transform_0(%arg0: i32) -> (i32, i32, i32, i32) {
    %c0_i32 = arith.constant 0 : i32
    %c0_i32_0 = arith.constant 0 : i32
    %c0_i32_1 = arith.constant 0 : i32
    %c0_i32_2 = arith.constant 0 : i32
    return %arg0, %c0_i32, %c0_i32_0, %c0_i32_1 : i32, i32, i32, i32
  }
  func.func @transform_1(%arg0: i32) -> (i32, i32) {
    %c0_i32 = arith.constant 0 : i32
    %c0_i32_0 = arith.constant 0 : i32
    %c0_i32_1 = arith.constant 0 : i32
    return %c0_i32, %c0_i32_0 : i32, i32
  }
  func.func @transform_2(%arg0: i32) -> (i32, i32) {
    %c0_i32 = arith.constant 0 : i32
    %c0_i32_0 = arith.constant 0 : i32
    %c0_i32_1 = arith.constant 0 : i32
    return %c0_i32, %c0_i32_0 : i32, i32
  }
  func.func @transform_3(%arg0: i32) -> (i32, i32, i32) {
    %c0_i32 = arith.constant 0 : i32
    %c0_i32_0 = arith.constant 0 : i32
    %c0_i32_1 = arith.constant 0 : i32
    return %arg0, %c0_i32, %c0_i32_0 : i32, i32, i32
  }
  func.func @transform_4(%arg0: i32) -> (i32, i32, i32) {
    %c0_i32 = arith.constant 0 : i32
    %c0_i32_0 = arith.constant 0 : i32
    %c0_i32_1 = arith.constant 0 : i32
    return %arg0, %c0_i32, %c0_i32_0 : i32, i32, i32
  }
  func.func @transform_5(%arg0: i32) -> (i32, i32, i32) {
    %c0_i32 = arith.constant 0 : i32
    %c0_i32_0 = arith.constant 0 : i32
    %c0_i32_1 = arith.constant 0 : i32
    return %arg0, %c0_i32, %c0_i32_0 : i32, i32, i32
  }
  func.func @transform_6(%arg0: i32) -> (i32, i32, i32) {
    %c0_i32 = arith.constant 0 : i32
    %c0_i32_0 = arith.constant 0 : i32
    %c0_i32_1 = arith.constant 0 : i32
    return %arg0, %c0_i32, %c0_i32_0 : i32, i32, i32
  }
}

</mosaic_0001>

<llo_original>
// kernel: tpu_custom_call.1
$region0: #{tpu_custom_call.1}
  #allocation0 [shape = 'u32[]', space=smem, size = 0x4, offset = 0x4, fixed_abs, tag = 'smem constant byte address 0x4 - core index']
  #allocation1 [shape = 'u32[144,128]{1,0:T(1,128)}', space=vmem, size = 0x12000, scoped, tag = 'internal scratch']
  %s0 = inlined_call_operand.vmem [shape: bf16[2,18,18,4], index: 0, kind: input, shape index: {}]
  %s1 = inlined_call_operand.vmem [shape: bf16[36,8], index: 1, kind: input, shape index: {}]
  %s2 = inlined_call_operand.vmem [shape: bf16[4,8], index: 2, kind: input, shape index: {}]
  %s3 = inlined_call_operand.vmem [shape: f32[2,256,8], index: 3, kind: output, shape index: {0}]
  %s4 = inlined_call_operand.vmem [shape: f32[2,256,8], index: 4, kind: output, shape index: {1}]
  %s5 = inlined_call_operand.hbm [shape: f32[2,2,8], index: 5, kind: output, shape index: {2}]
  %s6 = inlined_call_operand.hbm [shape: f32[2,2,8], index: 6, kind: output, shape index: {3}]
  %7 = xla_tuple %s3, %s4, %s5, %s6
  %s8 = sld [smem:[#allocation0]]
  $region69: #{tpu_custom_call.1} parent=0
    _
  %s10 = ssub.s32 1, %s8
  %s11 = scalar_select 0, %s10, %s8
  $region1: #{tpu_custom_call.1} parent=0
    #allocation2 [shape = 'u8[2048]{0}', space=vmem, size = 0x800, scoped, tag = 'output window, operand 2']
    #allocation3 [shape = 's32[2]{0}', space=sflag, size = 0x8, scoped, tag = 'scoped memory for tpu_custom_call.1']
    #allocation4 [shape = 'u8[2048]{0}', space=vmem, size = 0x800, scoped, tag = 'output window, operand 3']
    #allocation5 [shape = 's32[2]{0}', space=sflag, size = 0x8, scoped, tag = 'scoped memory for tpu_custom_call.1']
    %12 = vsyncpa [#allocation3], 0
    %s13 = scalar_lea.sflag [#allocation3], 1
    %14 = vsyncpa %s13, 0
    %15 = vsyncpa [#allocation5], 0
    %s16 = scalar_lea.sflag [#allocation5], 1
    %17 = vsyncpa %s16, 0
    loop: start=0, step=1, limit=4
    $region2: #{tpu_custom_call.1} parent=1 // loop_pre_header
      _
    $region3: #{tpu_custom_call.1} parent=1 // loop_header
      %s19 = sphi 0, %s23
      %p20 = scmp.ge.s32.totalorder %s19, 4
      %s29 = sphi 0, %s31
      %s32 = sphi 0, %s29
      %s33 = sphi 0, %s32
      %s49 = sphi 0, %s33
      %s53 = sphi 0, %s53
      %s55 = sphi 0, %s53
      %s56 = sphi 0, %s55
      %s70 = sphi 0, %s56
      %s74 = sphi 0, %s74
      %s76 = sphi 0, %s74
      %s77 = sphi 0, %s76
      %s91 = sphi 0, %s77
      %s97 = sphi 0, %s99
      %s100 = sphi 0, %s97
      %s101 = sphi 0, %s100
      %s117 = sphi 0, %s101
      %s123 = sphi 0, %s125
      %s126 = sphi 0, %s123
      %s127 = sphi 0, %s126
      %s143 = sphi 0, %s127
      %s149 = sphi 0, %s151
      %s152 = sphi 0, %s149
      %s153 = sphi 0, %s152
      %s169 = sphi 0, %s153
      %s175 = sphi 0, %s177
      %s178 = sphi 0, %s175
      %s179 = sphi 0, %s178
      %s195 = sphi 0, %s179
    $region4: #{tpu_custom_call.1} parent=1 // loop_header_branch
      %22 = sbr.rel (%p20) target = $region8
    $region5: #{tpu_custom_call.1} parent=1 // loop_body
      %s24 = ssub.s32 %s19, 1
      %s25 = ssub.s32 %s19, 2
      %s26 = sadd.s32 %s19, 1
      %s27 = ssub.s32 %s19, %s26
      %p28 = scmp.eq.s32.totalorder %s27, 0
      %s30 = sadd.s32 %s29, 1
      %s31 = scalar_select %p28, %s29, %s30
      %p34 = pneg %p28
      %p35 = scmp.eq.s32.totalorder %s19, 1
      %p36 = por %p34, %p35
      %p37 = scmp.ne.s32.totalorder %s29, %s32
      %p38 = scmp.eq.s32.totalorder %s19, 0
      %p39 = por %p37, %p38
      %p40 = scmp.ne.s32.totalorder %s29, %s32
      %p41 = scmp.eq.s32.totalorder %s24, 1
      %p42 = por %p40, %p41
      %p43 = scmp.ne.s32.totalorder %s32, %s33
      %p44 = scmp.eq.s32.totalorder %s24, 0
      %p45 = por %p43, %p44
      %p46 = scmp.ne.s32.totalorder %s32, %s33
      %p47 = scmp.eq.s32.totalorder %s25, 1
      %p48 = por %p46, %p47
      %p50 = scmp.ne.s32.totalorder %s33, %s49
      %p51 = scmp.eq.s32.totalorder %s25, 0
      %p52 = por %p50, %p51
      %s54 = sadd.s32 %s53, 1
      %p57 = scmp.eq.s32.totalorder %s19, 1
      %p58 = scmp.ne.s32.totalorder %s53, %s55
      %p59 = scmp.eq.s32.totalorder %s19, 0
      %p60 = por %p58, %p59
      %p61 = scmp.ne.s32.totalorder %s53, %s55
      %p62 = scmp.eq.s32.totalorder %s24, 1
      %p63 = por %p61, %p62
      %p64 = scmp.ne.s32.totalorder %s55, %s56
      %p65 = scmp.eq.s32.totalorder %s24, 0
      %p66 = por %p64, %p65
      %p67 = scmp.ne.s32.totalorder %s55, %s56
      %p68 = scmp.eq.s32.totalorder %s25, 1
      %p69 = por %p67, %p68
      %p71 = scmp.ne.s32.totalorder %s56, %s70
      %p72 = scmp.eq.s32.totalorder %s25, 0
      %p73 = por %p71, %p72
      %s75 = sadd.s32 %s74, 1
      %p78 = scmp.eq.s32.totalorder %s19, 1
      %p79 = scmp.ne.s32.totalorder %s74, %s76
      %p80 = scmp.eq.s32.totalorder %s19, 0
      %p81 = por %p79, %p80
      %p82 = scmp.ne.s32.totalorder %s74, %s76
      %p83 = scmp.eq.s32.totalorder %s24, 1
      %p84 = por %p82, %p83
      %p85 = scmp.ne.s32.totalorder %s76, %s77
      %p86 = scmp.eq.s32.totalorder %s24, 0
      %p87 = por %p85, %p86
      %p88 = scmp.ne.s32.totalorder %s76, %s77
      %p89 = scmp.eq.s32.totalorder %s25, 1
      %p90 = por %p88, %p89
      %p92 = scmp.ne.s32.totalorder %s77, %s91
      %p93 = scmp.eq.s32.totalorder %s25, 0
      %p94 = por %p92, %p93
      %s95 = ssub.s32 %s19, %s26
      %p96 = scmp.eq.s32.totalorder %s95, 0
      %s98 = sadd.s32 %s97, 1
      %s99 = scalar_select %p96, %s97, %s98
      %p102 = pneg %p96
      %p103 = scmp.eq.s32.totalorder %s19, 1
      %p104 = por %p102, %p103
      %p105 = scmp.ne.s32.totalorder %s97, %s100
      %p106 = scmp.eq.s32.totalorder %s19, 0
      %p107 = por %p105, %p106
      %p108 = scmp.ne.s32.totalorder %s97, %s100
      %p109 = scmp.eq.s32.totalorder %s24, 1
      %p110 = por %p108, %p109
      %p111 = scmp.ne.s32.totalorder %s100, %s101
      %p112 = scmp.eq.s32.totalorder %s24, 0
      %p113 = por %p111, %p112
      %p114 = scmp.ne.s32.totalorder %s100, %s101
      %p115 = scmp.eq.s32.totalorder %s25, 1
      %p116 = por %p114, %p115
      %p118 = scmp.ne.s32.totalorder %s101, %s117
      %p119 = scmp.eq.s32.totalorder %s25, 0
      %p120 = por %p118, %p119
      %s121 = ssub.s32 %s19, %s26
      %p122 = scmp.eq.s32.totalorder %s121, 0
      %s124 = sadd.s32 %s123, 1
      %s125 = scalar_select %p122, %s123, %s124
      %p128 = pneg %p122
      %p129 = scmp.eq.s32.totalorder %s19, 1
      %p130 = por %p128, %p129
      %p131 = scmp.ne.s32.totalorder %s123, %s126
      %p132 = scmp.eq.s32.totalorder %s19, 0
      %p133 = por %p131, %p132
      %p134 = scmp.ne.s32.totalorder %s123, %s126
      %p135 = scmp.eq.s32.totalorder %s24, 1
      %p136 = por %p134, %p135
      %p137 = scmp.ne.s32.totalorder %s126, %s127
      %p138 = scmp.eq.s32.totalorder %s24, 0
      %p139 = por %p137, %p138
      %p140 = scmp.ne.s32.totalorder %s126, %s127
      %p141 = scmp.eq.s32.totalorder %s25, 1
      %p142 = por %p140, %p141
      %p144 = scmp.ne.s32.totalorder %s127, %s143
      %p145 = scmp.eq.s32.totalorder %s25, 0
      %p146 = por %p144, %p145
      %s147 = ssub.s32 %s19, %s26
      %p148 = scmp.eq.s32.totalorder %s147, 0
      %s150 = sadd.s32 %s149, 1
      %s151 = scalar_select %p148, %s149, %s150
      %p154 = pneg %p148
      %p155 = scmp.eq.s32.totalorder %s19, 1
      %p156 = por %p154, %p155
      %p157 = scmp.ne.s32.totalorder %s149, %s152
      %p158 = scmp.eq.s32.totalorder %s19, 0
      %p159 = por %p157, %p158
      %p160 = scmp.ne.s32.totalorder %s149, %s152
      %p161 = scmp.eq.s32.totalorder %s24, 1
      %p162 = por %p160, %p161
      %p163 = scmp.ne.s32.totalorder %s152, %s153
      %p164 = scmp.eq.s32.totalorder %s24, 0
      %p165 = por %p163, %p164
      %p166 = scmp.ne.s32.totalorder %s152, %s153
      %p167 = scmp.eq.s32.totalorder %s25, 1
      %p168 = por %p166, %p167
      %p170 = scmp.ne.s32.totalorder %s153, %s169
      %p171 = scmp.eq.s32.totalorder %s25, 0
      %p172 = por %p170, %p171
      %s173 = ssub.s32 %s19, %s26
      %p174 = scmp.eq.s32.totalorder %s173, 0
      %s176 = sadd.s32 %s175, 1
      %s177 = scalar_select %p174, %s175, %s176
      %p180 = pneg %p174
      %p181 = scmp.eq.s32.totalorder %s19, 1
      %p182 = por %p180, %p181
      %p183 = scmp.ne.s32.totalorder %s175, %s178
      %p184 = scmp.eq.s32.totalorder %s19, 0
      %p185 = por %p183, %p184
      %p186 = scmp.ne.s32.totalorder %s175, %s178
      %p187 = scmp.eq.s32.totalorder %s24, 1
      %p188 = por %p186, %p187
      %p189 = scmp.ne.s32.totalorder %s178, %s179
      %p190 = scmp.eq.s32.totalorder %s24, 0
      %p191 = por %p189, %p190
      %p192 = scmp.ne.s32.totalorder %s178, %s179
      %p193 = scmp.eq.s32.totalorder %s25, 1
      %p194 = por %p192, %p193
      %p196 = scmp.ne.s32.totalorder %s179, %s195
      %p197 = scmp.eq.s32.totalorder %s25, 0
      %p198 = por %p196, %p197
      %p199 = scmp.le.s32.totalorder 1, %s19
      %p200 = scmp.lt.s32.totalorder %s19, 3
      %p201 = pnand %p199, %p200
      %p202 = pneg %p201
      // Predicated region
      $region9: #{tpu_custom_call.1} parent=5 // pred_check
        _
      $region10: #{tpu_custom_call.1} parent=5 // pred_check_branch
        %204 = sbr.rel (%p201) target = $region12
      $region11: #{tpu_custom_call.1} parent=5 // pred_region
        %s205 = ssub.s32 %s19, 1
        // Predicated region
        $region13: #{tpu_custom_call.1} parent=11 // pred_check
          %p206 = pneg %p66
        $region14: #{tpu_custom_call.1} parent=11 // pred_check_branch
          %208 = sbr.rel (%p206) target = $region16
        $region15: #{tpu_custom_call.1} parent=11 // pred_region
          _
        $region16: #{tpu_custom_call.1} parent=11 // pred_fallthru
          _
        // Predicated region
        $region17: #{tpu_custom_call.1} parent=11 // pred_check
          %p209 = pneg %p87
        $region18: #{tpu_custom_call.1} parent=11 // pred_check_branch
          %211 = sbr.rel (%p209) target = $region20
        $region19: #{tpu_custom_call.1} parent=11 // pred_region
          _
        $region20: #{tpu_custom_call.1} parent=11 // pred_fallthru
          _
      $region12: #{tpu_custom_call.1} parent=5 // pred_fallthru
        _
      %p212 = scmp.lt.s32.totalorder %s19, 2
      // Predicated region
      $region21: #{tpu_custom_call.1} parent=5 // pred_check
        %p213 = pneg %p212
      $region22: #{tpu_custom_call.1} parent=5 // pred_check_branch
        %215 = sbr.rel (%p213) target = $region24
      $region23: #{tpu_custom_call.1} parent=5 // pred_region
        // Predicated region
        $region25: #{tpu_custom_call.1} parent=23 // pred_check
          %p216 = pneg %p39
        $region26: #{tpu_custom_call.1} parent=23 // pred_check_branch
          %218 = sbr.rel (%p216) target = $region28
        $region27: #{tpu_custom_call.1} parent=23 // pred_region
          %p219 = scmp.lt.s32.totalorder %s19, 1
          %s220 = scalar_select %p219, %s19, 1
          %s221 = smul.addr %s220, 54
          %s222 = smul.addr %s221, 4
          %s223 = scalar_lea.vmem %s0, %s222
        $region28: #{tpu_custom_call.1} parent=23 // pred_fallthru
          _
      $region24: #{tpu_custom_call.1} parent=5 // pred_fallthru
        _
      %p224 = scmp.le.s32.totalorder 1, %s19
      %p225 = scmp.lt.s32.totalorder %s19, 3
      %p226 = pnand %p224, %p225
      %p227 = pneg %p226
      // Predicated region
      $region29: #{tpu_custom_call.1} parent=5 // pred_check
        _
      $region30: #{tpu_custom_call.1} parent=5 // pred_check_branch
        %229 = sbr.rel (%p226) target = $region32
      $region31: #{tpu_custom_call.1} parent=5 // pred_region
        %s230 = ssub.s32 %s19, 1
        %p231 = scmp.lt.s32.totalorder %s24, 1
        %s232 = scalar_select %p231, %s24, 1
        %s233 = smul.addr %s232, 54
        %s234 = smul.addr %s233, 4
        %s235 = scalar_lea.vmem %s0, %s234
        %p236 = pneg %p45
        %p237 = pneg %p42
        %p238 = pneg %p66
        %p239 = pneg %p63
        %p240 = pneg %p87
        %p241 = pneg %p84
        %p242 = pneg %p113
        %p243 = pneg %p110
        %p244 = scmp.lt.s32.totalorder %s24, 1
        %s245 = scalar_select %p244, %s24, 1
        %s246 = smul.addr %s245, 32
        %s247 = smul.addr %s246, 8
        %s248 = scalar_lea.vmem %s3, %s247
        %p249 = pneg %p139
        %p250 = pneg %p136
        %p251 = scmp.lt.s32.totalorder %s24, 1
        %s252 = scalar_select %p251, %s24, 1
        %s253 = smul.addr %s252, 32
        %s254 = smul.addr %s253, 8
        %s255 = scalar_lea.vmem %s4, %s254
        %p256 = pneg %p165
        %p257 = pneg %p162
        %s258 = sand.u32 %s152, 1
        %s259 = scalar_lea.sflag [#allocation3], %s258
        %s260 = sand.u32 %s152, 1
        %s261 = smul.addr %s260, 2
        %s262 = scalar_lea.vmem [#allocation2], %s261
        %p263 = pneg %p191
        %p264 = pneg %p188
        %s265 = sand.u32 %s178, 1
        %s266 = scalar_lea.sflag [#allocation5], %s265
        %s267 = sand.u32 %s178, 1
        %s268 = smul.addr %s267, 2
        %s269 = scalar_lea.vmem [#allocation4], %s268
        %p270 = scmp.lt.s32.totalorder %s24, 1
        %s271 = scalar_select %p270, %s24, 1
        %s272 = smul.addr %s271, 54
        %s273 = smul.addr %s272, 4
        %s274 = scalar_lea.vmem %s0, %s273
        %p275 = scmp.lt.s32.totalorder %s24, 1
        %s276 = scalar_select %p275, %s24, 1
        %s277 = smul.addr %s276, 32
        %s278 = smul.addr %s277, 8
        %s279 = scalar_lea.vmem %s3, %s278
        %p280 = scmp.lt.s32.totalorder %s24, 1
        %s281 = scalar_select %p280, %s24, 1
        %s282 = smul.addr %s281, 32
        %s283 = smul.addr %s282, 8
        %s284 = scalar_lea.vmem %s4, %s283
        %v286 = vld [vmem:[%s274] sm:$0xf]
        %v287 = vld [vmem:[%s274 + $0x4] sm:$0xf]
        %v288 = vld [vmem:[%s274 + $0x8] sm:$0x1]
        %v289 = vld [vmem:[%s274 + $0xc] sm:$0xf]
        %v290 = vld [vmem:[%s274 + $0x10] sm:$0xf]
        %v291 = vld [vmem:[%s274 + $0x14] sm:$0x1]
        %v292 = vld [vmem:[%s274 + $0x18] sm:$0xf]
        %v293 = vld [vmem:[%s274 + $0x1c] sm:$0xf]
        %v294 = vld [vmem:[%s274 + $0x20] sm:$0x1]
        %v295 = vld [vmem:[%s274 + $0x24] sm:$0xf]
        %v296 = vld [vmem:[%s274 + $0x28] sm:$0xf]
        %v297 = vld [vmem:[%s274 + $0x2c] sm:$0x1]
        %v298 = vld [vmem:[%s274 + $0x30] sm:$0xf]
        %v299 = vld [vmem:[%s274 + $0x34] sm:$0xf]
        %v300 = vld [vmem:[%s274 + $0x38] sm:$0x1]
        %v301 = vld [vmem:[%s274 + $0x3c] sm:$0xf]
        %v302 = vld [vmem:[%s274 + $0x40] sm:$0xf]
        %v303 = vld [vmem:[%s274 + $0x44] sm:$0x1]
        %v304 = vld [vmem:[%s274 + $0x48] sm:$0xf]
        %v305 = vld [vmem:[%s274 + $0x4c] sm:$0xf]
        %v306 = vld [vmem:[%s274 + $0x50] sm:$0x1]
        %v307 = vld [vmem:[%s274 + $0x54] sm:$0xf]
        %v308 = vld [vmem:[%s274 + $0x58] sm:$0xf]
        %v309 = vld [vmem:[%s274 + $0x5c] sm:$0x1]
        %v310 = vld [vmem:[%s274 + $0x60] sm:$0xf]
        %v311 = vld [vmem:[%s274 + $0x64] sm:$0xf]
        %v312 = vld [vmem:[%s274 + $0x68] sm:$0x1]
        %v313 = vld [vmem:[%s274 + $0x6c] sm:$0xf]
        %v314 = vld [vmem:[%s274 + $0x70] sm:$0xf]
        %v315 = vld [vmem:[%s274 + $0x74] sm:$0x1]
        %v316 = vld [vmem:[%s274 + $0x78] sm:$0xf]
        %v317 = vld [vmem:[%s274 + $0x7c] sm:$0xf]
        %v318 = vld [vmem:[%s274 + $0x80] sm:$0x1]
        %v319 = vld [vmem:[%s274 + $0x84] sm:$0xf]
        %v320 = vld [vmem:[%s274 + $0x88] sm:$0xf]
        %v321 = vld [vmem:[%s274 + $0x8c] sm:$0x1]
        %v322 = vld [vmem:[%s274 + $0x90] sm:$0xf]
        %v323 = vld [vmem:[%s274 + $0x94] sm:$0xf]
        %v324 = vld [vmem:[%s274 + $0x98] sm:$0x1]
        %v325 = vld [vmem:[%s274 + $0x9c] sm:$0xf]
        %v326 = vld [vmem:[%s274 + $0xa0] sm:$0xf]
        %v327 = vld [vmem:[%s274 + $0xa4] sm:$0x1]
        %v328 = vld [vmem:[%s274 + $0xa8] sm:$0xf]
        %v329 = vld [vmem:[%s274 + $0xac] sm:$0xf]
        %v330 = vld [vmem:[%s274 + $0xb0] sm:$0x1]
        %v331 = vld [vmem:[%s274 + $0xb4] sm:$0xf]
        %v332 = vld [vmem:[%s274 + $0xb8] sm:$0xf]
        %v333 = vld [vmem:[%s274 + $0xbc] sm:$0x1]
        %v334 = vld [vmem:[%s274 + $0xc0] sm:$0xf]
        %v335 = vld [vmem:[%s274 + $0xc4] sm:$0xf]
        %v336 = vld [vmem:[%s274 + $0xc8] sm:$0x1]
        %v337 = vld [vmem:[%s274 + $0xcc] sm:$0xf]
        %v338 = vld [vmem:[%s274 + $0xd0] sm:$0xf]
        %v339 = vld [vmem:[%s274 + $0xd4] sm:$0x1]
        %vm340 = vsmask.f32 3328
        %vm341 = vsmask.f32 7440
        %vm342 = vmor %vm340, %vm341
        %v344 = vshrl.u32 %v286, 16
        %v346 = vrot.slane %v344, 4
        %v347 = vshll.u32 %v286, 16
        %v349 = vrot.slane %v347, 5
        %v350 = vor.u32 %v346, %v349
        %v351 = vrot.slane %v350, 4
        %v353 = vshll.u32 %v287, 16
        %v355 = vrot.slane %v353, 5
        %v356 = vsel %vm342, %v351, %v355
        %v357 = vshrl.u32 %v287, 16
        %v359 = vrot.slane %v357, 4
        %v360 = vor.u32 %v359, %v355
        %v361 = vrot.slane %v360, 4
        %v363 = vshll.u32 %v288, 16
        %v365 = vrot.slane %v363, 5
        %v366 = vsel %vm342, %v361, %v365
        %v368 = vshrl.u32 %v289, 16
        %v370 = vrot.slane %v368, 4
        %v371 = vshll.u32 %v289, 16
        %v373 = vrot.slane %v371, 5
        %v374 = vor.u32 %v370, %v373
        %v375 = vrot.slane %v374, 4
        %v377 = vshll.u32 %v290, 16
        %v379 = vrot.slane %v377, 5
        %v380 = vsel %vm342, %v375, %v379
        %v381 = vshrl.u32 %v290, 16
        %v383 = vrot.slane %v381, 4
        %v384 = vor.u32 %v383, %v379
        %v385 = vrot.slane %v384, 4
        %v387 = vshll.u32 %v291, 16
        %v389 = vrot.slane %v387, 5
        %v390 = vsel %vm342, %v385, %v389
        %v392 = vshrl.u32 %v292, 16
        %v394 = vrot.slane %v392, 4
        %v395 = vshll.u32 %v292, 16
        %v397 = vrot.slane %v395, 5
        %v398 = vor.u32 %v394, %v397
        %v399 = vrot.slane %v398, 4
        %v401 = vshll.u32 %v293, 16
        %v403 = vrot.slane %v401, 5
        %v404 = vsel %vm342, %v399, %v403
        %v405 = vshrl.u32 %v293, 16
        %v407 = vrot.slane %v405, 4
        %v408 = vor.u32 %v407, %v403
        %v409 = vrot.slane %v408, 4
        %v411 = vshll.u32 %v294, 16
        %v413 = vrot.slane %v411, 5
        %v414 = vsel %vm342, %v409, %v413
        %v416 = vshrl.u32 %v295, 16
        %v418 = vrot.slane %v416, 4
        %v419 = vshll.u32 %v295, 16
        %v421 = vrot.slane %v419, 5
        %v422 = vor.u32 %v418, %v421
        %v423 = vrot.slane %v422, 4
        %v425 = vshll.u32 %v296, 16
        %v427 = vrot.slane %v425, 5
        %v428 = vsel %vm342, %v423, %v427
        %v429 = vshrl.u32 %v296, 16
        %v431 = vrot.slane %v429, 4
        %v432 = vor.u32 %v431, %v427
        %v433 = vrot.slane %v432, 4
        %v435 = vshll.u32 %v297, 16
        %v437 = vrot.slane %v435, 5
        %v438 = vsel %vm342, %v433, %v437
        %v440 = vshrl.u32 %v298, 16
        %v442 = vrot.slane %v440, 4
        %v443 = vshll.u32 %v298, 16
        %v445 = vrot.slane %v443, 5
        %v446 = vor.u32 %v442, %v445
        %v447 = vrot.slane %v446, 4
        %v449 = vshll.u32 %v299, 16
        %v451 = vrot.slane %v449, 5
        %v452 = vsel %vm342, %v447, %v451
        %v453 = vshrl.u32 %v299, 16
        %v455 = vrot.slane %v453, 4
        %v456 = vor.u32 %v455, %v451
        %v457 = vrot.slane %v456, 4
        %v459 = vshll.u32 %v300, 16
        %v461 = vrot.slane %v459, 5
        %v462 = vsel %vm342, %v457, %v461
        %v464 = vshrl.u32 %v301, 16
        %v466 = vrot.slane %v464, 4
        %v467 = vshll.u32 %v301, 16
        %v469 = vrot.slane %v467, 5
        %v470 = vor.u32 %v466, %v469
        %v471 = vrot.slane %v470, 4
        %v473 = vshll.u32 %v302, 16
        %v475 = vrot.slane %v473, 5
        %v476 = vsel %vm342, %v471, %v475
        %v477 = vshrl.u32 %v302, 16
        %v479 = vrot.slane %v477, 4
        %v480 = vor.u32 %v479, %v475
        %v481 = vrot.slane %v480, 4
        %v483 = vshll.u32 %v303, 16
        %v485 = vrot.slane %v483, 5
        %v486 = vsel %vm342, %v481, %v485
        %v488 = vshrl.u32 %v304, 16
        %v490 = vrot.slane %v488, 4
        %v491 = vshll.u32 %v304, 16
        %v493 = vrot.slane %v491, 5
        %v494 = vor.u32 %v490, %v493
        %v495 = vrot.slane %v494, 4
        %v497 = vshll.u32 %v305, 16
        %v499 = vrot.slane %v497, 5
        %v500 = vsel %vm342, %v495, %v499
        %v501 = vshrl.u32 %v305, 16
        %v503 = vrot.slane %v501, 4
        %v504 = vor.u32 %v503, %v499
        %v505 = vrot.slane %v504, 4
        %v507 = vshll.u32 %v306, 16
        %v509 = vrot.slane %v507, 5
        %v510 = vsel %vm342, %v505, %v509
        %v512 = vshrl.u32 %v307, 16
        %v514 = vrot.slane %v512, 4
        %v515 = vshll.u32 %v307, 16
        %v517 = vrot.slane %v515, 5
        %v518 = vor.u32 %v514, %v517
        %v519 = vrot.slane %v518, 4
        %v521 = vshll.u32 %v308, 16
        %v523 = vrot.slane %v521, 5
        %v524 = vsel %vm342, %v519, %v523
        %v525 = vshrl.u32 %v308, 16
        %v527 = vrot.slane %v525, 4
        %v528 = vor.u32 %v527, %v523
        %v529 = vrot.slane %v528, 4
        %v531 = vshll.u32 %v309, 16
        %v533 = vrot.slane %v531, 5
        %v534 = vsel %vm342, %v529, %v533
        %v536 = vshrl.u32 %v310, 16
        %v538 = vrot.slane %v536, 4
        %v539 = vshll.u32 %v310, 16
        %v541 = vrot.slane %v539, 5
        %v542 = vor.u32 %v538, %v541
        %v543 = vrot.slane %v542, 4
        %v545 = vshll.u32 %v311, 16
        %v547 = vrot.slane %v545, 5
        %v548 = vsel %vm342, %v543, %v547
        %v549 = vshrl.u32 %v311, 16
        %v551 = vrot.slane %v549, 4
        %v552 = vor.u32 %v551, %v547
        %v553 = vrot.slane %v552, 4
        %v555 = vshll.u32 %v312, 16
        %v557 = vrot.slane %v555, 5
        %v558 = vsel %vm342, %v553, %v557
        %v560 = vshrl.u32 %v313, 16
        %v562 = vrot.slane %v560, 4
        %v563 = vshll.u32 %v313, 16
        %v565 = vrot.slane %v563, 5
        %v566 = vor.u32 %v562, %v565
        %v567 = vrot.slane %v566, 4
        %v569 = vshll.u32 %v314, 16
        %v571 = vrot.slane %v569, 5
        %v572 = vsel %vm342, %v567, %v571
        %v573 = vshrl.u32 %v314, 16
        %v575 = vrot.slane %v573, 4
        %v576 = vor.u32 %v575, %v571
        %v577 = vrot.slane %v576, 4
        %v579 = vshll.u32 %v315, 16
        %v581 = vrot.slane %v579, 5
        %v582 = vsel %vm342, %v577, %v581
        %v584 = vshrl.u32 %v316, 16
        %v586 = vrot.slane %v584, 4
        %v587 = vshll.u32 %v316, 16
        %v589 = vrot.slane %v587, 5
        %v590 = vor.u32 %v586, %v589
        %v591 = vrot.slane %v590, 4
        %v593 = vshll.u32 %v317, 16
        %v595 = vrot.slane %v593, 5
        %v596 = vsel %vm342, %v591, %v595
        %v597 = vshrl.u32 %v317, 16
        %v599 = vrot.slane %v597, 4
        %v600 = vor.u32 %v599, %v595
        %v601 = vrot.slane %v600, 4
        %v603 = vshll.u32 %v318, 16
        %v605 = vrot.slane %v603, 5
        %v606 = vsel %vm342, %v601, %v605
        %v608 = vshrl.u32 %v319, 16
        %v610 = vrot.slane %v608, 4
        %v611 = vshll.u32 %v319, 16
        %v613 = vrot.slane %v611, 5
        %v614 = vor.u32 %v610, %v613
        %v615 = vrot.slane %v614, 4
        %v617 = vshll.u32 %v320, 16
        %v619 = vrot.slane %v617, 5
        %v620 = vsel %vm342, %v615, %v619
        %v621 = vshrl.u32 %v320, 16
        %v623 = vrot.slane %v621, 4
        %v624 = vor.u32 %v623, %v619
        %v625 = vrot.slane %v624, 4
        %v627 = vshll.u32 %v321, 16
        %v629 = vrot.slane %v627, 5
        %v630 = vsel %vm342, %v625, %v629
        %v632 = vshrl.u32 %v322, 16
        %v634 = vrot.slane %v632, 4
        %v635 = vshll.u32 %v322, 16
        %v637 = vrot.slane %v635, 5
        %v638 = vor.u32 %v634, %v637
        %v639 = vrot.slane %v638, 4
        %v641 = vshll.u32 %v323, 16
        %v643 = vrot.slane %v641, 5
        %v644 = vsel %vm342, %v639, %v643
        %v645 = vshrl.u32 %v323, 16
        %v647 = vrot.slane %v645, 4
        %v648 = vor.u32 %v647, %v643
        %v649 = vrot.slane %v648, 4
        %v651 = vshll.u32 %v324, 16
        %v653 = vrot.slane %v651, 5
        %v654 = vsel %vm342, %v649, %v653
        %v656 = vshrl.u32 %v325, 16
        %v658 = vrot.slane %v656, 4
        %v659 = vshll.u32 %v325, 16
        %v661 = vrot.slane %v659, 5
        %v662 = vor.u32 %v658, %v661
        %v663 = vrot.slane %v662, 4
        %v665 = vshll.u32 %v326, 16
        %v667 = vrot.slane %v665, 5
        %v668 = vsel %vm342, %v663, %v667
        %v669 = vshrl.u32 %v326, 16
        %v671 = vrot.slane %v669, 4
        %v672 = vor.u32 %v671, %v667
        %v673 = vrot.slane %v672, 4
        %v675 = vshll.u32 %v327, 16
        %v677 = vrot.slane %v675, 5
        %v678 = vsel %vm342, %v673, %v677
        %v680 = vshrl.u32 %v328, 16
        %v682 = vrot.slane %v680, 4
        %v683 = vshll.u32 %v328, 16
        %v685 = vrot.slane %v683, 5
        %v686 = vor.u32 %v682, %v685
        %v687 = vrot.slane %v686, 4
        %v689 = vshll.u32 %v329, 16
        %v691 = vrot.slane %v689, 5
        %v692 = vsel %vm342, %v687, %v691
        %v693 = vshrl.u32 %v329, 16
        %v695 = vrot.slane %v693, 4
        %v696 = vor.u32 %v695, %v691
        %v697 = vrot.slane %v696, 4
        %v699 = vshll.u32 %v330, 16
        %v701 = vrot.slane %v699, 5
        %v702 = vsel %vm342, %v697, %v701
        %v704 = vshrl.u32 %v331, 16
        %v706 = vrot.slane %v704, 4
        %v707 = vshll.u32 %v331, 16
        %v709 = vrot.slane %v707, 5
        %v710 = vor.u32 %v706, %v709
        %v711 = vrot.slane %v710, 4
        %v713 = vshll.u32 %v332, 16
        %v715 = vrot.slane %v713, 5
        %v716 = vsel %vm342, %v711, %v715
        %v717 = vshrl.u32 %v332, 16
        %v719 = vrot.slane %v717, 4
        %v720 = vor.u32 %v719, %v715
        %v721 = vrot.slane %v720, 4
        %v723 = vshll.u32 %v333, 16
        %v725 = vrot.slane %v723, 5
        %v726 = vsel %vm342, %v721, %v725
        %vm775 = vcmask 1042432
        %vm776 = vcmask 1046532
        %vm777 = vmor %vm775, %vm776
        %v778 = vrot.slane %v286, 5
        %v779 = vrot.slane %v778, 4
        %v780 = vrot.slane %v287, 5
        %v781 = vsel %vm777, %v779, %v780
        %v782 = vrot.slane %v780, 4
        %v783 = vrot.slane %v288, 5
        %v784 = vsel %vm777, %v782, %v783
        %v785 = vrot.slane %v289, 5
        %v786 = vrot.slane %v785, 4
        %v787 = vrot.slane %v290, 5
        %v788 = vsel %vm777, %v786, %v787
        %v789 = vrot.slane %v787, 4
        %v790 = vrot.slane %v291, 5
        %v791 = vsel %vm777, %v789, %v790
        %v792 = vrot.slane %v292, 5
        %v793 = vrot.slane %v792, 4
        %v794 = vrot.slane %v293, 5
        %v795 = vsel %vm777, %v793, %v794
        %v796 = vrot.slane %v794, 4
        %v797 = vrot.slane %v294, 5
        %v798 = vsel %vm777, %v796, %v797
        %v799 = vrot.slane %v295, 5
        %v800 = vrot.slane %v799, 4
        %v801 = vrot.slane %v296, 5
        %v802 = vsel %vm777, %v800, %v801
        %v803 = vrot.slane %v801, 4
        %v804 = vrot.slane %v297, 5
        %v805 = vsel %vm777, %v803, %v804
        %v806 = vrot.slane %v298, 5
        %v807 = vrot.slane %v806, 4
        %v808 = vrot.slane %v299, 5
        %v809 = vsel %vm777, %v807, %v808
        %v810 = vrot.slane %v808, 4
        %v811 = vrot.slane %v300, 5
        %v812 = vsel %vm777, %v810, %v811
        %v813 = vrot.slane %v301, 5
        %v814 = vrot.slane %v813, 4
        %v815 = vrot.slane %v302, 5
        %v816 = vsel %vm777, %v814, %v815
        %v817 = vrot.slane %v815, 4
        %v818 = vrot.slane %v303, 5
        %v819 = vsel %vm777, %v817, %v818
        %v820 = vrot.slane %v304, 5
        %v821 = vrot.slane %v820, 4
        %v822 = vrot.slane %v305, 5
        %v823 = vsel %vm777, %v821, %v822
        %v824 = vrot.slane %v822, 4
        %v825 = vrot.slane %v306, 5
        %v826 = vsel %vm777, %v824, %v825
        %v827 = vrot.slane %v307, 5
        %v828 = vrot.slane %v827, 4
        %v829 = vrot.slane %v308, 5
        %v830 = vsel %vm777, %v828, %v829
        %v831 = vrot.slane %v829, 4
        %v832 = vrot.slane %v309, 5
        %v833 = vsel %vm777, %v831, %v832
        %v834 = vrot.slane %v310, 5
        %v835 = vrot.slane %v834, 4
        %v836 = vrot.slane %v311, 5
        %v837 = vsel %vm777, %v835, %v836
        %v838 = vrot.slane %v836, 4
        %v839 = vrot.slane %v312, 5
        %v840 = vsel %vm777, %v838, %v839
        %v841 = vrot.slane %v313, 5
        %v842 = vrot.slane %v841, 4
        %v843 = vrot.slane %v314, 5
        %v844 = vsel %vm777, %v842, %v843
        %v845 = vrot.slane %v843, 4
        %v846 = vrot.slane %v315, 5
        %v847 = vsel %vm777, %v845, %v846
        %v848 = vrot.slane %v316, 5
        %v849 = vrot.slane %v848, 4
        %v850 = vrot.slane %v317, 5
        %v851 = vsel %vm777, %v849, %v850
        %v852 = vrot.slane %v850, 4
        %v853 = vrot.slane %v318, 5
        %v854 = vsel %vm777, %v852, %v853
        %v855 = vrot.slane %v319, 5
        %v856 = vrot.slane %v855, 4
        %v857 = vrot.slane %v320, 5
        %v858 = vsel %vm777, %v856, %v857
        %v859 = vrot.slane %v857, 4
        %v860 = vrot.slane %v321, 5
        %v861 = vsel %vm777, %v859, %v860
        %v862 = vrot.slane %v322, 5
        %v863 = vrot.slane %v862, 4
        %v864 = vrot.slane %v323, 5
        %v865 = vsel %vm777, %v863, %v864
        %v866 = vrot.slane %v864, 4
        %v867 = vrot.slane %v324, 5
        %v868 = vsel %vm777, %v866, %v867
        %v869 = vrot.slane %v325, 5
        %v870 = vrot.slane %v869, 4
        %v871 = vrot.slane %v326, 5
        %v872 = vsel %vm777, %v870, %v871
        %v873 = vrot.slane %v871, 4
        %v874 = vrot.slane %v327, 5
        %v875 = vsel %vm777, %v873, %v874
        %v876 = vrot.slane %v328, 5
        %v877 = vrot.slane %v876, 4
        %v878 = vrot.slane %v329, 5
        %v879 = vsel %vm777, %v877, %v878
        %v880 = vrot.slane %v878, 4
        %v881 = vrot.slane %v330, 5
        %v882 = vsel %vm777, %v880, %v881
        %v883 = vrot.slane %v331, 5
        %v884 = vrot.slane %v883, 4
        %v885 = vrot.slane %v332, 5
        %v886 = vsel %vm777, %v884, %v885
        %v887 = vrot.slane %v885, 4
        %v888 = vrot.slane %v333, 5
        %v889 = vsel %vm777, %v887, %v888
        %v891 = vshrl.u32 %v334, 16
        %v893 = vrot.slane %v891, 4
        %v894 = vshll.u32 %v334, 16
        %v896 = vrot.slane %v894, 5
        %v897 = vor.u32 %v893, %v896
        %v898 = vrot.slane %v897, 4
        %v900 = vshll.u32 %v335, 16
        %v902 = vrot.slane %v900, 5
        %v903 = vsel %vm342, %v898, %v902
        %v904 = vshrl.u32 %v335, 16
        %v906 = vrot.slane %v904, 4
        %v907 = vor.u32 %v906, %v902
        %v908 = vrot.slane %v907, 4
        %v910 = vshll.u32 %v336, 16
        %v912 = vrot.slane %v910, 5
        %v913 = vsel %vm342, %v908, %v912
        %v917 = vrot.slane %v334, 5
        %v918 = vrot.slane %v917, 4
        %v919 = vrot.slane %v335, 5
        %v920 = vsel %vm777, %v918, %v919
        %v921 = vrot.slane %v919, 4
        %v922 = vrot.slane %v336, 5
        %v923 = vsel %vm777, %v921, %v922
        %v925 = vshrl.u32 %v337, 16
        %v927 = vrot.slane %v925, 4
        %v928 = vshll.u32 %v337, 16
        %v930 = vrot.slane %v928, 5
        %v931 = vor.u32 %v927, %v930
        %v932 = vrot.slane %v931, 4
        %v934 = vshll.u32 %v338, 16
        %v936 = vrot.slane %v934, 5
        %v937 = vsel %vm342, %v932, %v936
        %v938 = vshrl.u32 %v338, 16
        %v940 = vrot.slane %v938, 4
        %v941 = vor.u32 %v940, %v936
        %v942 = vrot.slane %v941, 4
        %v944 = vshll.u32 %v339, 16
        %v946 = vrot.slane %v944, 5
        %v947 = vsel %vm342, %v942, %v946
        %v951 = vrot.slane %v337, 5
        %v952 = vrot.slane %v951, 4
        %v953 = vrot.slane %v338, 5
        %v954 = vsel %vm777, %v952, %v953
        %v955 = vrot.slane %v953, 4
        %v956 = vrot.slane %v339, 5
        %v957 = vsel %vm777, %v955, %v956
        %v958 = vunpack.c.l.b16 %v286
        %v959 = vunpack.c.l.b16 %v287
        %v960 = vunpack.c.l.b16 %v289
        %v961 = vunpack.c.l.b16 %v290
        %v962 = vunpack.c.l.b16 %v292
        %v963 = vunpack.c.l.b16 %v293
        %v964 = vunpack.c.l.b16 %v295
        %v965 = vunpack.c.l.b16 %v296
        %v966 = vunpack.c.l.b16 %v298
        %v967 = vunpack.c.l.b16 %v299
        %v968 = vunpack.c.l.b16 %v301
        %v969 = vunpack.c.l.b16 %v302
        %v970 = vunpack.c.l.b16 %v304
        %v971 = vunpack.c.l.b16 %v305
        %v972 = vunpack.c.l.b16 %v307
        %v973 = vunpack.c.l.b16 %v308
        %v974 = vunpack.c.l.b16 %v310
        %v975 = vunpack.c.l.b16 %v311
        %v976 = vunpack.c.l.b16 %v313
        %v977 = vunpack.c.l.b16 %v314
        %v978 = vunpack.c.l.b16 %v316
        %v979 = vunpack.c.l.b16 %v317
        %v980 = vunpack.c.l.b16 %v319
        %v981 = vunpack.c.l.b16 %v320
        %v982 = vunpack.c.l.b16 %v322
        %v983 = vunpack.c.l.b16 %v323
        %v984 = vunpack.c.l.b16 %v325
        %v985 = vunpack.c.l.b16 %v326
        %v986 = vunpack.c.l.b16 %v328
        %v987 = vunpack.c.l.b16 %v329
        %v988 = vunpack.c.l.b16 %v331
        %v989 = vunpack.c.l.b16 %v332
        %v990 = vpack.c.b16 %v959, %v958
        %v991 = vpack.c.b16 %v961, %v960
        %v992 = vpack.c.b16 %v963, %v962
        %v993 = vpack.c.b16 %v965, %v964
        %v994 = vpack.c.b16 %v967, %v966
        %v995 = vpack.c.b16 %v969, %v968
        %v996 = vpack.c.b16 %v971, %v970
        %v997 = vpack.c.b16 %v973, %v972
        %v998 = vpack.c.b16 %v975, %v974
        %v999 = vpack.c.b16 %v977, %v976
        %v1000 = vpack.c.b16 %v979, %v978
        %v1001 = vpack.c.b16 %v981, %v980
        %v1002 = vpack.c.b16 %v983, %v982
        %v1003 = vpack.c.b16 %v985, %v984
        %v1004 = vpack.c.b16 %v987, %v986
        %v1005 = vpack.c.b16 %v989, %v988
        %v1006 = vunpack.c.l.b16 %v356
        %v1007 = vunpack.c.l.b16 %v366
        %v1008 = vunpack.c.l.b16 %v380
        %v1009 = vunpack.c.l.b16 %v390
        %v1010 = vunpack.c.l.b16 %v404
        %v1011 = vunpack.c.l.b16 %v414
        %v1012 = vunpack.c.l.b16 %v428
        %v1013 = vunpack.c.l.b16 %v438
        %v1014 = vunpack.c.l.b16 %v452
        %v1015 = vunpack.c.l.b16 %v462
        %v1016 = vunpack.c.l.b16 %v476
        %v1017 = vunpack.c.l.b16 %v486
        %v1018 = vunpack.c.l.b16 %v500
        %v1019 = vunpack.c.l.b16 %v510
        %v1020 = vunpack.c.l.b16 %v524
        %v1021 = vunpack.c.l.b16 %v534
        %v1022 = vunpack.c.l.b16 %v548
        %v1023 = vunpack.c.l.b16 %v558
        %v1024 = vunpack.c.l.b16 %v572
        %v1025 = vunpack.c.l.b16 %v582
        %v1026 = vunpack.c.l.b16 %v596
        %v1027 = vunpack.c.l.b16 %v606
        %v1028 = vunpack.c.l.b16 %v620
        %v1029 = vunpack.c.l.b16 %v630
        %v1030 = vunpack.c.l.b16 %v644
        %v1031 = vunpack.c.l.b16 %v654
        %v1032 = vunpack.c.l.b16 %v668
        %v1033 = vunpack.c.l.b16 %v678
        %v1034 = vunpack.c.l.b16 %v692
        %v1035 = vunpack.c.l.b16 %v702
        %v1036 = vunpack.c.l.b16 %v716
        %v1037 = vunpack.c.l.b16 %v726
        %v1038 = vpack.c.b16 %v1007, %v1006
        %v1039 = vpack.c.b16 %v1009, %v1008
        %v1040 = vpack.c.b16 %v1011, %v1010
        %v1041 = vpack.c.b16 %v1013, %v1012
        %v1042 = vpack.c.b16 %v1015, %v1014
        %v1043 = vpack.c.b16 %v1017, %v1016
        %v1044 = vpack.c.b16 %v1019, %v1018
        %v1045 = vpack.c.b16 %v1021, %v1020
        %v1046 = vpack.c.b16 %v1023, %v1022
        %v1047 = vpack.c.b16 %v1025, %v1024
        %v1048 = vpack.c.b16 %v1027, %v1026
        %v1049 = vpack.c.b16 %v1029, %v1028
        %v1050 = vpack.c.b16 %v1031, %v1030
        %v1051 = vpack.c.b16 %v1033, %v1032
        %v1052 = vpack.c.b16 %v1035, %v1034
        %v1053 = vpack.c.b16 %v1037, %v1036
        %1054 = vrot.lane.b32.xlu0 %v1038, 4
        %v1055 = vpop.permute.xlu0 %1054
        %1056 = vrot.lane.b32.xlu0 %v1039, 4
        %v1057 = vpop.permute.xlu0 %1056
        %1058 = vrot.lane.b32.xlu0 %v1040, 4
        %v1059 = vpop.permute.xlu0 %1058
        %1060 = vrot.lane.b32.xlu0 %v1041, 4
        %v1061 = vpop.permute.xlu0 %1060
        %1062 = vrot.lane.b32.xlu0 %v1042, 4
        %v1063 = vpop.permute.xlu0 %1062
        %1064 = vrot.lane.b32.xlu0 %v1043, 4
        %v1065 = vpop.permute.xlu0 %1064
        %1066 = vrot.lane.b32.xlu0 %v1044, 4
        %v1067 = vpop.permute.xlu0 %1066
        %1068 = vrot.lane.b32.xlu0 %v1045, 4
        %v1069 = vpop.permute.xlu0 %1068
        %1070 = vrot.lane.b32.xlu0 %v1046, 4
        %v1071 = vpop.permute.xlu0 %1070
        %1072 = vrot.lane.b32.xlu0 %v1047, 4
        %v1073 = vpop.permute.xlu0 %1072
        %1074 = vrot.lane.b32.xlu0 %v1048, 4
        %v1075 = vpop.permute.xlu0 %1074
        %1076 = vrot.lane.b32.xlu0 %v1049, 4
        %v1077 = vpop.permute.xlu0 %1076
        %1078 = vrot.lane.b32.xlu0 %v1050, 4
        %v1079 = vpop.permute.xlu0 %1078
        %1080 = vrot.lane.b32.xlu0 %v1051, 4
        %v1081 = vpop.permute.xlu0 %1080
        %1082 = vrot.lane.b32.xlu0 %v1052, 4
        %v1083 = vpop.permute.xlu0 %1082
        %1084 = vrot.lane.b32.xlu0 %v1053, 4
        %v1085 = vpop.permute.xlu0 %1084
        %v1086 = vunpack.c.l.b16 %v781
        %v1087 = vunpack.c.l.b16 %v784
        %v1088 = vunpack.c.l.b16 %v788
        %v1089 = vunpack.c.l.b16 %v791
        %v1090 = vunpack.c.l.b16 %v795
        %v1091 = vunpack.c.l.b16 %v798
        %v1092 = vunpack.c.l.b16 %v802
        %v1093 = vunpack.c.l.b16 %v805
        %v1094 = vunpack.c.l.b16 %v809
        %v1095 = vunpack.c.l.b16 %v812
        %v1096 = vunpack.c.l.b16 %v816
        %v1097 = vunpack.c.l.b16 %v819
        %v1098 = vunpack.c.l.b16 %v823
        %v1099 = vunpack.c.l.b16 %v826
        %v1100 = vunpack.c.l.b16 %v830
        %v1101 = vunpack.c.l.b16 %v833
        %v1102 = vunpack.c.l.b16 %v837
        %v1103 = vunpack.c.l.b16 %v840
        %v1104 = vunpack.c.l.b16 %v844
        %v1105 = vunpack.c.l.b16 %v847
        %v1106 = vunpack.c.l.b16 %v851
        %v1107 = vunpack.c.l.b16 %v854
        %v1108 = vunpack.c.l.b16 %v858
        %v1109 = vunpack.c.l.b16 %v861
        %v1110 = vunpack.c.l.b16 %v865
        %v1111 = vunpack.c.l.b16 %v868
        %v1112 = vunpack.c.l.b16 %v872
        %v1113 = vunpack.c.l.b16 %v875
        %v1114 = vunpack.c.l.b16 %v879
        %v1115 = vunpack.c.l.b16 %v882
        %v1116 = vunpack.c.l.b16 %v886
        %v1117 = vunpack.c.l.b16 %v889
        %v1118 = vpack.c.b16 %v1087, %v1086
        %v1119 = vpack.c.b16 %v1089, %v1088
        %v1120 = vpack.c.b16 %v1091, %v1090
        %v1121 = vpack.c.b16 %v1093, %v1092
        %v1122 = vpack.c.b16 %v1095, %v1094
        %v1123 = vpack.c.b16 %v1097, %v1096
        %v1124 = vpack.c.b16 %v1099, %v1098
        %v1125 = vpack.c.b16 %v1101, %v1100
        %v1126 = vpack.c.b16 %v1103, %v1102
        %v1127 = vpack.c.b16 %v1105, %v1104
        %v1128 = vpack.c.b16 %v1107, %v1106
        %v1129 = vpack.c.b16 %v1109, %v1108
        %v1130 = vpack.c.b16 %v1111, %v1110
        %v1131 = vpack.c.b16 %v1113, %v1112
        %v1132 = vpack.c.b16 %v1115, %v1114
        %v1133 = vpack.c.b16 %v1117, %v1116
        %1134 = vrot.lane.b32.xlu0 %v1118, 8
        %v1135 = vpop.permute.xlu0 %1134
        %1136 = vrot.lane.b32.xlu0 %v1119, 8
        %v1137 = vpop.permute.xlu0 %1136
        %1138 = vrot.lane.b32.xlu0 %v1120, 8
        %v1139 = vpop.permute.xlu0 %1138
        %1140 = vrot.lane.b32.xlu0 %v1121, 8
        %v1141 = vpop.permute.xlu0 %1140
        %1142 = vrot.lane.b32.xlu0 %v1122, 8
        %v1143 = vpop.permute.xlu0 %1142
        %1144 = vrot.lane.b32.xlu0 %v1123, 8
        %v1145 = vpop.permute.xlu0 %1144
        %1146 = vrot.lane.b32.xlu0 %v1124, 8
        %v1147 = vpop.permute.xlu0 %1146
        %1148 = vrot.lane.b32.xlu0 %v1125, 8
        %v1149 = vpop.permute.xlu0 %1148
        %1150 = vrot.lane.b32.xlu0 %v1126, 8
        %v1151 = vpop.permute.xlu0 %1150
        %1152 = vrot.lane.b32.xlu0 %v1127, 8
        %v1153 = vpop.permute.xlu0 %1152
        %1154 = vrot.lane.b32.xlu0 %v1128, 8
        %v1155 = vpop.permute.xlu0 %1154
        %1156 = vrot.lane.b32.xlu0 %v1129, 8
        %v1157 = vpop.permute.xlu0 %1156
        %1158 = vrot.lane.b32.xlu0 %v1130, 8
        %v1159 = vpop.permute.xlu0 %1158
        %1160 = vrot.lane.b32.xlu0 %v1131, 8
        %v1161 = vpop.permute.xlu0 %1160
        %1162 = vrot.lane.b32.xlu0 %v1132, 8
        %v1163 = vpop.permute.xlu0 %1162
        %1164 = vrot.lane.b32.xlu0 %v1133, 8
        %v1165 = vpop.permute.xlu0 %1164
        %v1166 = vunpack.c.l.b16 %v334
        %v1167 = vunpack.c.l.b16 %v335
        %v1168 = vpack.c.b16 %v1167, %v1166
        %1169 = vrot.lane.b32.xlu0 %v991, 12
        %v1170 = vpop.permute.xlu0 %1169
        %1171 = vrot.lane.b32.xlu0 %v992, 12
        %v1172 = vpop.permute.xlu0 %1171
        %1173 = vrot.lane.b32.xlu0 %v993, 12
        %v1174 = vpop.permute.xlu0 %1173
        %1175 = vrot.lane.b32.xlu0 %v994, 12
        %v1176 = vpop.permute.xlu0 %1175
        %1177 = vrot.lane.b32.xlu0 %v995, 12
        %v1178 = vpop.permute.xlu0 %1177
        %1179 = vrot.lane.b32.xlu0 %v996, 12
        %v1180 = vpop.permute.xlu0 %1179
        %1181 = vrot.lane.b32.xlu0 %v997, 12
        %v1182 = vpop.permute.xlu0 %1181
        %1183 = vrot.lane.b32.xlu0 %v998, 12
        %v1184 = vpop.permute.xlu0 %1183
        %1185 = vrot.lane.b32.xlu0 %v999, 12
        %v1186 = vpop.permute.xlu0 %1185
        %1187 = vrot.lane.b32.xlu0 %v1000, 12
        %v1188 = vpop.permute.xlu0 %1187
        %1189 = vrot.lane.b32.xlu0 %v1001, 12
        %v1190 = vpop.permute.xlu0 %1189
        %1191 = vrot.lane.b32.xlu0 %v1002, 12
        %v1192 = vpop.permute.xlu0 %1191
        %1193 = vrot.lane.b32.xlu0 %v1003, 12
        %v1194 = vpop.permute.xlu0 %1193
        %1195 = vrot.lane.b32.xlu0 %v1004, 12
        %v1196 = vpop.permute.xlu0 %1195
        %1197 = vrot.lane.b32.xlu0 %v1005, 12
        %v1198 = vpop.permute.xlu0 %1197
        %1199 = vrot.lane.b32.xlu0 %v1168, 12
        %v1200 = vpop.permute.xlu0 %1199
        %v1201 = vunpack.c.l.b16 %v903
        %v1202 = vunpack.c.l.b16 %v913
        %v1203 = vpack.c.b16 %v1202, %v1201
        %1204 = vrot.lane.b32.xlu0 %v1039, 16
        %v1205 = vpop.permute.xlu0 %1204
        %1206 = vrot.lane.b32.xlu0 %v1040, 16
        %v1207 = vpop.permute.xlu0 %1206
        %1208 = vrot.lane.b32.xlu0 %v1041, 16
        %v1209 = vpop.permute.xlu0 %1208
        %1210 = vrot.lane.b32.xlu0 %v1042, 16
        %v1211 = vpop.permute.xlu0 %1210
        %1212 = vrot.lane.b32.xlu0 %v1043, 16
        %v1213 = vpop.permute.xlu0 %1212
        %1214 = vrot.lane.b32.xlu0 %v1044, 16
        %v1215 = vpop.permute.xlu0 %1214
        %1216 = vrot.lane.b32.xlu0 %v1045, 16
        %v1217 = vpop.permute.xlu0 %1216
        %1218 = vrot.lane.b32.xlu0 %v1046, 16
        %v1219 = vpop.permute.xlu0 %1218
        %1220 = vrot.lane.b32.xlu0 %v1047, 16
        %v1221 = vpop.permute.xlu0 %1220
        %1222 = vrot.lane.b32.xlu0 %v1048, 16
        %v1223 = vpop.permute.xlu0 %1222
        %1224 = vrot.lane.b32.xlu0 %v1049, 16
        %v1225 = vpop.permute.xlu0 %1224
        %1226 = vrot.lane.b32.xlu0 %v1050, 16
        %v1227 = vpop.permute.xlu0 %1226
        %1228 = vrot.lane.b32.xlu0 %v1051, 16
        %v1229 = vpop.permute.xlu0 %1228
        %1230 = vrot.lane.b32.xlu0 %v1052, 16
        %v1231 = vpop.permute.xlu0 %1230
        %1232 = vrot.lane.b32.xlu0 %v1053, 16
        %v1233 = vpop.permute.xlu0 %1232
        %1234 = vrot.lane.b32.xlu0 %v1203, 16
        %v1235 = vpop.permute.xlu0 %1234
        %v1236 = vunpack.c.l.b16 %v920
        %v1237 = vunpack.c.l.b16 %v923
        %v1238 = vpack.c.b16 %v1237, %v1236
        %1239 = vrot.lane.b32.xlu0 %v1119, 20
        %v1240 = vpop.permute.xlu0 %1239
        %1241 = vrot.lane.b32.xlu0 %v1120, 20
        %v1242 = vpop.permute.xlu0 %1241
        %1243 = vrot.lane.b32.xlu0 %v1121, 20
        %v1244 = vpop.permute.xlu0 %1243
        %1245 = vrot.lane.b32.xlu0 %v1122, 20
        %v1246 = vpop.permute.xlu0 %1245
        %1247 = vrot.lane.b32.xlu0 %v1123, 20
        %v1248 = vpop.permute.xlu0 %1247
        %1249 = vrot.lane.b32.xlu0 %v1124, 20
        %v1250 = vpop.permute.xlu0 %1249
        %1251 = vrot.lane.b32.xlu0 %v1125, 20
        %v1252 = vpop.permute.xlu0 %1251
        %1253 = vrot.lane.b32.xlu0 %v1126, 20
        %v1254 = vpop.permute.xlu0 %1253
        %1255 = vrot.lane.b32.xlu0 %v1127, 20
        %v1256 = vpop.permute.xlu0 %1255
        %1257 = vrot.lane.b32.xlu0 %v1128, 20
        %v1258 = vpop.permute.xlu0 %1257
        %1259 = vrot.lane.b32.xlu0 %v1129, 20
        %v1260 = vpop.permute.xlu0 %1259
        %1261 = vrot.lane.b32.xlu0 %v1130, 20
        %v1262 = vpop.permute.xlu0 %1261
        %1263 = vrot.lane.b32.xlu0 %v1131, 20
        %v1264 = vpop.permute.xlu0 %1263
        %1265 = vrot.lane.b32.xlu0 %v1132, 20
        %v1266 = vpop.permute.xlu0 %1265
        %1267 = vrot.lane.b32.xlu0 %v1133, 20
        %v1268 = vpop.permute.xlu0 %1267
        %1269 = vrot.lane.b32.xlu0 %v1238, 20
        %v1270 = vpop.permute.xlu0 %1269
        %v1271 = vunpack.c.l.b16 %v337
        %v1272 = vunpack.c.l.b16 %v338
        %v1273 = vpack.c.b16 %v1272, %v1271
        %1274 = vrot.lane.b32.xlu0 %v992, 24
        %v1275 = vpop.permute.xlu0 %1274
        %1276 = vrot.lane.b32.xlu0 %v993, 24
        %v1277 = vpop.permute.xlu0 %1276
        %1278 = vrot.lane.b32.xlu0 %v994, 24
        %v1279 = vpop.permute.xlu0 %1278
        %1280 = vrot.lane.b32.xlu0 %v995, 24
        %v1281 = vpop.permute.xlu0 %1280
        %1282 = vrot.lane.b32.xlu0 %v996, 24
        %v1283 = vpop.permute.xlu0 %1282
        %1284 = vrot.lane.b32.xlu0 %v997, 24
        %v1285 = vpop.permute.xlu0 %1284
        %1286 = vrot.lane.b32.xlu0 %v998, 24
        %v1287 = vpop.permute.xlu0 %1286
        %1288 = vrot.lane.b32.xlu0 %v999, 24
        %v1289 = vpop.permute.xlu0 %1288
        %1290 = vrot.lane.b32.xlu0 %v1000, 24
        %v1291 = vpop.permute.xlu0 %1290
        %1292 = vrot.lane.b32.xlu0 %v1001, 24
        %v1293 = vpop.permute.xlu0 %1292
        %1294 = vrot.lane.b32.xlu0 %v1002, 24
        %v1295 = vpop.permute.xlu0 %1294
        %1296 = vrot.lane.b32.xlu0 %v1003, 24
        %v1297 = vpop.permute.xlu0 %1296
        %1298 = vrot.lane.b32.xlu0 %v1004, 24
        %v1299 = vpop.permute.xlu0 %1298
        %1300 = vrot.lane.b32.xlu0 %v1005, 24
        %v1301 = vpop.permute.xlu0 %1300
        %1302 = vrot.lane.b32.xlu0 %v1168, 24
        %v1303 = vpop.permute.xlu0 %1302
        %1304 = vrot.lane.b32.xlu0 %v1273, 24
        %v1305 = vpop.permute.xlu0 %1304
        %v1306 = vunpack.c.l.b16 %v937
        %v1307 = vunpack.c.l.b16 %v947
        %v1308 = vpack.c.b16 %v1307, %v1306
        %1309 = vrot.lane.b32.xlu0 %v1040, 28
        %v1310 = vpop.permute.xlu0 %1309
        %1311 = vrot.lane.b32.xlu0 %v1041, 28
        %v1312 = vpop.permute.xlu0 %1311
        %1313 = vrot.lane.b32.xlu0 %v1042, 28
        %v1314 = vpop.permute.xlu0 %1313
        %1315 = vrot.lane.b32.xlu0 %v1043, 28
        %v1316 = vpop.permute.xlu0 %1315
        %1317 = vrot.lane.b32.xlu0 %v1044, 28
        %v1318 = vpop.permute.xlu0 %1317
        %1319 = vrot.lane.b32.xlu0 %v1045, 28
        %v1320 = vpop.permute.xlu0 %1319
        %1321 = vrot.lane.b32.xlu0 %v1046, 28
        %v1322 = vpop.permute.xlu0 %1321
        %1323 = vrot.lane.b32.xlu0 %v1047, 28
        %v1324 = vpop.permute.xlu0 %1323
        %1325 = vrot.lane.b32.xlu0 %v1048, 28
        %v1326 = vpop.permute.xlu0 %1325
        %1327 = vrot.lane.b32.xlu0 %v1049, 28
        %v1328 = vpop.permute.xlu0 %1327
        %1329 = vrot.lane.b32.xlu0 %v1050, 28
        %v1330 = vpop.permute.xlu0 %1329
        %1331 = vrot.lane.b32.xlu0 %v1051, 28
        %v1332 = vpop.permute.xlu0 %1331
        %1333 = vrot.lane.b32.xlu0 %v1052, 28
        %v1334 = vpop.permute.xlu0 %1333
        %1335 = vrot.lane.b32.xlu0 %v1053, 28
        %v1336 = vpop.permute.xlu0 %1335
        %1337 = vrot.lane.b32.xlu0 %v1203, 28
        %v1338 = vpop.permute.xlu0 %1337
        %1339 = vrot.lane.b32.xlu0 %v1308, 28
        %v1340 = vpop.permute.xlu0 %1339
        %v1341 = vunpack.c.l.b16 %v954
        %v1342 = vunpack.c.l.b16 %v957
        %v1343 = vpack.c.b16 %v1342, %v1341
        %1344 = vrot.lane.b32.xlu0 %v1120, 32
        %v1345 = vpop.permute.xlu0 %1344
        %1346 = vrot.lane.b32.xlu0 %v1121, 32
        %v1347 = vpop.permute.xlu0 %1346
        %1348 = vrot.lane.b32.xlu0 %v1122, 32
        %v1349 = vpop.permute.xlu0 %1348
        %1350 = vrot.lane.b32.xlu0 %v1123, 32
        %v1351 = vpop.permute.xlu0 %1350
        %1352 = vrot.lane.b32.xlu0 %v1124, 32
        %v1353 = vpop.permute.xlu0 %1352
        %1354 = vrot.lane.b32.xlu0 %v1125, 32
        %v1355 = vpop.permute.xlu0 %1354
        %1356 = vrot.lane.b32.xlu0 %v1126, 32
        %v1357 = vpop.permute.xlu0 %1356
        %1358 = vrot.lane.b32.xlu0 %v1127, 32
        %v1359 = vpop.permute.xlu0 %1358
        %1360 = vrot.lane.b32.xlu0 %v1128, 32
        %v1361 = vpop.permute.xlu0 %1360
        %1362 = vrot.lane.b32.xlu0 %v1129, 32
        %v1363 = vpop.permute.xlu0 %1362
        %1364 = vrot.lane.b32.xlu0 %v1130, 32
        %v1365 = vpop.permute.xlu0 %1364
        %1366 = vrot.lane.b32.xlu0 %v1131, 32
        %v1367 = vpop.permute.xlu0 %1366
        %1368 = vrot.lane.b32.xlu0 %v1132, 32
        %v1369 = vpop.permute.xlu0 %1368
        %1370 = vrot.lane.b32.xlu0 %v1133, 32
        %v1371 = vpop.permute.xlu0 %1370
        %1372 = vrot.lane.b32.xlu0 %v1238, 32
        %v1373 = vpop.permute.xlu0 %1372
        %1374 = vrot.lane.b32.xlu0 %v1343, 32
        %v1375 = vpop.permute.xlu0 %1374
        %vm1376 = vcmask 31744
        %v1379 = vsel %vm1376, %v990, %v1055
        %v1382 = vsel %vm1376, %v991, %v1057
        %v1385 = vsel %vm1376, %v992, %v1059
        %v1388 = vsel %vm1376, %v993, %v1061
        %v1391 = vsel %vm1376, %v994, %v1063
        %v1394 = vsel %vm1376, %v995, %v1065
        %v1397 = vsel %vm1376, %v996, %v1067
        %v1400 = vsel %vm1376, %v997, %v1069
        %v1403 = vsel %vm1376, %v998, %v1071
        %v1406 = vsel %vm1376, %v999, %v1073
        %v1409 = vsel %vm1376, %v1000, %v1075
        %v1412 = vsel %vm1376, %v1001, %v1077
        %v1415 = vsel %vm1376, %v1002, %v1079
        %v1418 = vsel %vm1376, %v1003, %v1081
        %v1421 = vsel %vm1376, %v1004, %v1083
        %v1424 = vsel %vm1376, %v1005, %v1085
        %vm1425 = vcmask 64512
        %v1427 = vsel %vm1425, %v1379, %v1135
        %v1429 = vsel %vm1425, %v1382, %v1137
        %v1431 = vsel %vm1425, %v1385, %v1139
        %v1433 = vsel %vm1425, %v1388, %v1141
        %v1435 = vsel %vm1425, %v1391, %v1143
        %v1437 = vsel %vm1425, %v1394, %v1145
        %v1439 = vsel %vm1425, %v1397, %v1147
        %v1441 = vsel %vm1425, %v1400, %v1149
        %v1443 = vsel %vm1425, %v1403, %v1151
        %v1445 = vsel %vm1425, %v1406, %v1153
        %v1447 = vsel %vm1425, %v1409, %v1155
        %v1449 = vsel %vm1425, %v1412, %v1157
        %v1451 = vsel %vm1425, %v1415, %v1159
        %v1453 = vsel %vm1425, %v1418, %v1161
        %v1455 = vsel %vm1425, %v1421, %v1163
        %v1457 = vsel %vm1425, %v1424, %v1165
        %vm1458 = vcmask 97280
        %v1460 = vsel %vm1458, %v1427, %v1170
        %v1462 = vsel %vm1458, %v1429, %v1172
        %v1464 = vsel %vm1458, %v1431, %v1174
        %v1466 = vsel %vm1458, %v1433, %v1176
        %v1468 = vsel %vm1458, %v1435, %v1178
        %v1470 = vsel %vm1458, %v1437, %v1180
        %v1472 = vsel %vm1458, %v1439, %v1182
        %v1474 = vsel %vm1458, %v1441, %v1184
        %v1476 = vsel %vm1458, %v1443, %v1186
        %v1478 = vsel %vm1458, %v1445, %v1188
        %v1480 = vsel %vm1458, %v1447, %v1190
        %v1482 = vsel %vm1458, %v1449, %v1192
        %v1484 = vsel %vm1458, %v1451, %v1194
        %v1486 = vsel %vm1458, %v1453, %v1196
        %v1488 = vsel %vm1458, %v1455, %v1198
        %v1490 = vsel %vm1458, %v1457, %v1200
        %vm1491 = vcmask 130048
        %v1493 = vsel %vm1491, %v1460, %v1205
        %v1495 = vsel %vm1491, %v1462, %v1207
        %v1497 = vsel %vm1491, %v1464, %v1209
        %v1499 = vsel %vm1491, %v1466, %v1211
        %v1501 = vsel %vm1491, %v1468, %v1213
        %v1503 = vsel %vm1491, %v1470, %v1215
        %v1505 = vsel %vm1491, %v1472, %v1217
        %v1507 = vsel %vm1491, %v1474, %v1219
        %v1509 = vsel %vm1491, %v1476, %v1221
        %v1511 = vsel %vm1491, %v1478, %v1223
        %v1513 = vsel %vm1491, %v1480, %v1225
        %v1515 = vsel %vm1491, %v1482, %v1227
        %v1517 = vsel %vm1491, %v1484, %v1229
        %v1519 = vsel %vm1491, %v1486, %v1231
        %v1521 = vsel %vm1491, %v1488, %v1233
        %v1523 = vsel %vm1491, %v1490, %v1235
        %vm1524 = vcmask 162816
        %v1526 = vsel %vm1524, %v1493, %v1240
        %v1528 = vsel %vm1524, %v1495, %v1242
        %v1530 = vsel %vm1524, %v1497, %v1244
        %v1532 = vsel %vm1524, %v1499, %v1246
        %v1534 = vsel %vm1524, %v1501, %v1248
        %v1536 = vsel %vm1524, %v1503, %v1250
        %v1538 = vsel %vm1524, %v1505, %v1252
        %v1540 = vsel %vm1524, %v1507, %v1254
        %v1542 = vsel %vm1524, %v1509, %v1256
        %v1544 = vsel %vm1524, %v1511, %v1258
        %v1546 = vsel %vm1524, %v1513, %v1260
        %v1548 = vsel %vm1524, %v1515, %v1262
        %v1550 = vsel %vm1524, %v1517, %v1264
        %v1552 = vsel %vm1524, %v1519, %v1266
        %v1554 = vsel %vm1524, %v1521, %v1268
        %v1556 = vsel %vm1524, %v1523, %v1270
        %vm1557 = vcmask 195584
        %v1559 = vsel %vm1557, %v1526, %v1275
        %v1561 = vsel %vm1557, %v1528, %v1277
        %v1563 = vsel %vm1557, %v1530, %v1279
        %v1565 = vsel %vm1557, %v1532, %v1281
        %v1567 = vsel %vm1557, %v1534, %v1283
        %v1569 = vsel %vm1557, %v1536, %v1285
        %v1571 = vsel %vm1557, %v1538, %v1287
        %v1573 = vsel %vm1557, %v1540, %v1289
        %v1575 = vsel %vm1557, %v1542, %v1291
        %v1577 = vsel %vm1557, %v1544, %v1293
        %v1579 = vsel %vm1557, %v1546, %v1295
        %v1581 = vsel %vm1557, %v1548, %v1297
        %v1583 = vsel %vm1557, %v1550, %v1299
        %v1585 = vsel %vm1557, %v1552, %v1301
        %v1587 = vsel %vm1557, %v1554, %v1303
        %v1589 = vsel %vm1557, %v1556, %v1305
        %vm1590 = vcmask 228352
        %v1592 = vsel %vm1590, %v1559, %v1310
        %v1594 = vsel %vm1590, %v1561, %v1312
        %v1596 = vsel %vm1590, %v1563, %v1314
        %v1598 = vsel %vm1590, %v1565, %v1316
        %v1600 = vsel %vm1590, %v1567, %v1318
        %v1602 = vsel %vm1590, %v1569, %v1320
        %v1604 = vsel %vm1590, %v1571, %v1322
        %v1606 = vsel %vm1590, %v1573, %v1324
        %v1608 = vsel %vm1590, %v1575, %v1326
        %v1610 = vsel %vm1590, %v1577, %v1328
        %v1612 = vsel %vm1590, %v1579, %v1330
        %v1614 = vsel %vm1590, %v1581, %v1332
        %v1616 = vsel %vm1590, %v1583, %v1334
        %v1618 = vsel %vm1590, %v1585, %v1336
        %v1620 = vsel %vm1590, %v1587, %v1338
        %v1622 = vsel %vm1590, %v1589, %v1340
        %vm1623 = vcmask 261120
        %v1625 = vsel %vm1623, %v1592, %v1345
        %v1627 = vsel %vm1623, %v1594, %v1347
        %v1629 = vsel %vm1623, %v1596, %v1349
        %v1631 = vsel %vm1623, %v1598, %v1351
        %v1633 = vsel %vm1623, %v1600, %v1353
        %v1635 = vsel %vm1623, %v1602, %v1355
        %v1637 = vsel %vm1623, %v1604, %v1357
        %v1639 = vsel %vm1623, %v1606, %v1359
        %v1641 = vsel %vm1623, %v1608, %v1361
        %v1643 = vsel %vm1623, %v1610, %v1363
        %v1645 = vsel %vm1623, %v1612, %v1365
        %v1647 = vsel %vm1623, %v1614, %v1367
        %v1649 = vsel %vm1623, %v1616, %v1369
        %v1651 = vsel %vm1623, %v1618, %v1371
        %v1653 = vsel %vm1623, %v1620, %v1373
        %v1655 = vsel %vm1623, %v1622, %v1375
        %v1656 = vld [vmem:[%s1] sm:$0xf]
        %v1657 = vld [vmem:[%s1 + $0x4] sm:$0xf]
        %v1658 = vld [vmem:[%s1 + $0x8] sm:$0xf]
        %v1659 = vld [vmem:[%s1 + $0xc] sm:$0xf]
        %v1660 = vld [vmem:[%s1 + $0x10] sm:$0x3]
        %v1666 = vunpack.c.l.b16 %v1656
        %v1667 = vunpack.c.l.b16 %v1657
        %v1668 = vunpack.c.l.b16 %v1658
        %v1669 = vunpack.c.l.b16 %v1659
        %v1670 = vunpack.c.l.b16 %v1660
        %v1671 = vpack.c.b16 %v1667, %v1666
        %v1672 = vpack.c.b16 %v1669, %v1668
        %v1673 = vpack.c.b16 %v1670, %v1670
        %vm1676 = vcmask 293888
        %v1677 = vsel %vm1676, %v1625, 0
        %v1679 = vsel %vm1676, %v1627, 0
        %v1681 = vsel %vm1676, %v1629, 0
        %v1683 = vsel %vm1676, %v1631, 0
        %v1685 = vsel %vm1676, %v1633, 0
        %v1687 = vsel %vm1676, %v1635, 0
        %v1689 = vsel %vm1676, %v1637, 0
        %v1691 = vsel %vm1676, %v1639, 0
        %v1693 = vsel %vm1676, %v1641, 0
        %v1695 = vsel %vm1676, %v1643, 0
        %v1697 = vsel %vm1676, %v1645, 0
        %v1699 = vsel %vm1676, %v1647, 0
        %v1701 = vsel %vm1676, %v1649, 0
        %v1703 = vsel %vm1676, %v1651, 0
        %v1705 = vsel %vm1676, %v1653, 0
        %v1707 = vsel %vm1676, %v1655, 0
        %vm1709 = vcmask 1041408
        %v1711 = vsel %vm1709, %v1673, 0
        %1713 = vmatprep.subr.bf16.mxu0 0
        %1714 = vmatpush1.bf16.msra.mxu0 %v1671
        %1715 = vmatprep.subr.bf16.mxu0 0
        %1716 = vmatpush1.bf16.msra.mxu0 %v1672
        %1717 = vmatprep.subr.bf16.mxu0 0
        %1718 = vmatpush1.bf16.msra.mxu0 %v1711
        %1719 = vmatprep.subr.bf16.mxu0 0
        %1720 = vmatpush1.bf16.msra.mxu0 0
        %1721 = vmatprep.subr.bf16.mxu0 0
        %1722 = vmatpush1.bf16.msra.mxu0 0
        %1723 = vmatprep.subr.bf16.mxu0 0
        %1724 = vmatpush1.bf16.msra.mxu0 0
        %1725 = vmatprep.subr.bf16.mxu0 0
        %1726 = vmatpush1.bf16.msra.mxu0 0
        %1727 = vmatprep.subr.bf16.mxu0 0
        %1728 = vmatpush1.bf16.msra.mxu0 0
        %1729 = vmatprep.subr.bf16.mxu0 0
        %1730 = vmatpush1.bf16.msra.mxu0 0
        %1731 = vmatprep.subr.bf16.mxu0 0
        %1732 = vmatpush1.bf16.msra.mxu0 0
        %1733 = vmatprep.subr.bf16.mxu0 0
        %1734 = vmatpush1.bf16.msra.mxu0 0
        %1735 = vmatprep.subr.bf16.mxu0 0
        %1736 = vmatpush1.bf16.msra.mxu0 0
        %1737 = vmatprep.subr.bf16.mxu0 0
        %1738 = vmatpush1.bf16.msra.mxu0 0
        %1739 = vmatprep.subr.bf16.mxu0 0
        %1740 = vmatpush1.bf16.msra.mxu0 0
        %1741 = vmatprep.subr.bf16.mxu0 0
        %1742 = vmatpush1.bf16.msra.mxu0 0
        %1743 = vmatprep.subr.bf16.mxu0 0
        %1744 = vmatpush1.bf16.msra.mxu0 0
        %1745 = vmatprep.mubr.bf16.mxu0 0
        %1746 = vmatmul.mubr.bf16.gmra.mrb[0].mxu0 %v1677
        %v1747 = vpop.f32.mrb[0].mxu0
        %v1748 = vadd.f32 0.0, %v1747
        %v1749 = vpop.f32.mrb[0].mxu0
        %v1750 = vpop.f32.mrb[0].mxu0
        %v1751 = vadd.f32 0.0, %v1750
        %v1752 = vpop.f32.mrb[0].mxu0
        %1753 = vmatprep.mubr.bf16.mxu0 0
        %1754 = vmatmul.mubr.bf16.gmra.mrb[0].mxu0 %v1679
        %v1755 = vpop.f32.mrb[0].mxu0
        %v1756 = vadd.f32 0.0, %v1755
        %v1757 = vpop.f32.mrb[0].mxu0
        %v1758 = vpop.f32.mrb[0].mxu0
        %v1759 = vadd.f32 0.0, %v1758
        %v1760 = vpop.f32.mrb[0].mxu0
        %1761 = vmatprep.mubr.bf16.mxu0 0
        %1762 = vmatmul.mubr.bf16.gmra.mrb[0].mxu0 %v1681
        %v1763 = vpop.f32.mrb[0].mxu0
        %v1764 = vadd.f32 0.0, %v1763
        %v1765 = vpop.f32.mrb[0].mxu0
        %v1766 = vpop.f32.mrb[0].mxu0
        %v1767 = vadd.f32 0.0, %v1766
        %v1768 = vpop.f32.mrb[0].mxu0
        %1769 = vmatprep.mubr.bf16.mxu0 0
        %1770 = vmatmul.mubr.bf16.gmra.mrb[0].mxu0 %v1683
        %v1771 = vpop.f32.mrb[0].mxu0
        %v1772 = vadd.f32 0.0, %v1771
        %v1773 = vpop.f32.mrb[0].mxu0
        %v1774 = vpop.f32.mrb[0].mxu0
        %v1775 = vadd.f32 0.0, %v1774
        %v1776 = vpop.f32.mrb[0].mxu0
        %1777 = vmatprep.mubr.bf16.mxu0 0
        %1778 = vmatmul.mubr.bf16.gmra.mrb[0].mxu0 %v1685
        %v1779 = vpop.f32.mrb[0].mxu0
        %v1780 = vadd.f32 0.0, %v1779
        %v1781 = vpop.f32.mrb[0].mxu0
        %v1782 = vpop.f32.mrb[0].mxu0
        %v1783 = vadd.f32 0.0, %v1782
        %v1784 = vpop.f32.mrb[0].mxu0
        %1785 = vmatprep.mubr.bf16.mxu0 0
        %1786 = vmatmul.mubr.bf16.gmra.mrb[0].mxu0 %v1687
        %v1787 = vpop.f32.mrb[0].mxu0
        %v1788 = vadd.f32 0.0, %v1787
        %v1789 = vpop.f32.mrb[0].mxu0
        %v1790 = vpop.f32.mrb[0].mxu0
        %v1791 = vadd.f32 0.0, %v1790
        %v1792 = vpop.f32.mrb[0].mxu0
        %1793 = vmatprep.mubr.bf16.mxu0 0
        %1794 = vmatmul.mubr.bf16.gmra.mrb[0].mxu0 %v1689
        %v1795 = vpop.f32.mrb[0].mxu0
        %v1796 = vadd.f32 0.0, %v1795
        %v1797 = vpop.f32.mrb[0].mxu0
        %v1798 = vpop.f32.mrb[0].mxu0
        %v1799 = vadd.f32 0.0, %v1798
        %v1800 = vpop.f32.mrb[0].mxu0
        %1801 = vmatprep.mubr.bf16.mxu0 0
        %1802 = vmatmul.mubr.bf16.gmra.mrb[0].mxu0 %v1691
        %v1803 = vpop.f32.mrb[0].mxu0
        %v1804 = vadd.f32 0.0, %v1803
        %v1805 = vpop.f32.mrb[0].mxu0
        %v1806 = vpop.f32.mrb[0].mxu0
        %v1807 = vadd.f32 0.0, %v1806
        %v1808 = vpop.f32.mrb[0].mxu0
        %1809 = vmatprep.mubr.bf16.mxu0 0
        %1810 = vmatmul.mubr.bf16.gmra.mrb[0].mxu0 %v1693
        %v1811 = vpop.f32.mrb[0].mxu0
        %v1812 = vadd.f32 0.0, %v1811
        %v1813 = vpop.f32.mrb[0].mxu0
        %v1814 = vpop.f32.mrb[0].mxu0
        %v1815 = vadd.f32 0.0, %v1814
        %v1816 = vpop.f32.mrb[0].mxu0
        %1817 = vmatprep.mubr.bf16.mxu0 0
        %1818 = vmatmul.mubr.bf16.gmra.mrb[0].mxu0 %v1695
        %v1819 = vpop.f32.mrb[0].mxu0
        %v1820 = vadd.f32 0.0, %v1819
        %v1821 = vpop.f32.mrb[0].mxu0
        %v1822 = vpop.f32.mrb[0].mxu0
        %v1823 = vadd.f32 0.0, %v1822
        %v1824 = vpop.f32.mrb[0].mxu0
        %1825 = vmatprep.mubr.bf16.mxu0 0
        %1826 = vmatmul.mubr.bf16.gmra.mrb[0].mxu0 %v1697
        %v1827 = vpop.f32.mrb[0].mxu0
        %v1828 = vadd.f32 0.0, %v1827
        %v1829 = vpop.f32.mrb[0].mxu0
        %v1830 = vpop.f32.mrb[0].mxu0
        %v1831 = vadd.f32 0.0, %v1830
        %v1832 = vpop.f32.mrb[0].mxu0
        %1833 = vmatprep.mubr.bf16.mxu0 0
        %1834 = vmatmul.mubr.bf16.gmra.mrb[0].mxu0 %v1699
        %v1835 = vpop.f32.mrb[0].mxu0
        %v1836 = vadd.f32 0.0, %v1835
        %v1837 = vpop.f32.mrb[0].mxu0
        %v1838 = vpop.f32.mrb[0].mxu0
        %v1839 = vadd.f32 0.0, %v1838
        %v1840 = vpop.f32.mrb[0].mxu0
        %1841 = vmatprep.mubr.bf16.mxu0 0
        %1842 = vmatmul.mubr.bf16.gmra.mrb[0].mxu0 %v1701
        %v1843 = vpop.f32.mrb[0].mxu0
        %v1844 = vadd.f32 0.0, %v1843
        %v1845 = vpop.f32.mrb[0].mxu0
        %v1846 = vpop.f32.mrb[0].mxu0
        %v1847 = vadd.f32 0.0, %v1846
        %v1848 = vpop.f32.mrb[0].mxu0
        %1849 = vmatprep.mubr.bf16.mxu0 0
        %1850 = vmatmul.mubr.bf16.gmra.mrb[0].mxu0 %v1703
        %v1851 = vpop.f32.mrb[0].mxu0
        %v1852 = vadd.f32 0.0, %v1851
        %v1853 = vpop.f32.mrb[0].mxu0
        %v1854 = vpop.f32.mrb[0].mxu0
        %v1855 = vadd.f32 0.0, %v1854
        %v1856 = vpop.f32.mrb[0].mxu0
        %1857 = vmatprep.mubr.bf16.mxu0 0
        %1858 = vmatmul.mubr.bf16.gmra.mrb[0].mxu0 %v1705
        %v1859 = vpop.f32.mrb[0].mxu0
        %v1860 = vadd.f32 0.0, %v1859
        %v1861 = vpop.f32.mrb[0].mxu0
        %v1862 = vpop.f32.mrb[0].mxu0
        %v1863 = vadd.f32 0.0, %v1862
        %v1864 = vpop.f32.mrb[0].mxu0
        %1865 = vmatprep.mubr.bf16.mxu0 0
        %1866 = vmatmul.mubr.bf16.gmra.mrb[0].mxu0 %v1707
        %v1867 = vpop.f32.mrb[0].mxu0
        %v1868 = vadd.f32 0.0, %v1867
        %v1869 = vpop.f32.mrb[0].mxu0
        %v1870 = vpop.f32.mrb[0].mxu0
        %v1871 = vadd.f32 0.0, %v1870
        %v1872 = vpop.f32.mrb[0].mxu0
        %1873 = vdwg.mxu0
        %1874 = vst.msk [vmem:[%s279] sm:$0xff] %vm1425, %v1748
        %1875 = vst.msk [vmem:[%s279 + $0x8] sm:$0xff] %vm1425, %v1751
        %1876 = vst.msk [vmem:[%s279 + $0x10] sm:$0xff] %vm1425, %v1756
        %1877 = vst.msk [vmem:[%s279 + $0x18] sm:$0xff] %vm1425, %v1759
        %1878 = vst.msk [vmem:[%s279 + $0x20] sm:$0xff] %vm1425, %v1764
        %1879 = vst.msk [vmem:[%s279 + $0x28] sm:$0xff] %vm1425, %v1767
        %1880 = vst.msk [vmem:[%s279 + $0x30] sm:$0xff] %vm1425, %v1772
        %1881 = vst.msk [vmem:[%s279 + $0x38] sm:$0xff] %vm1425, %v1775
        %1882 = vst.msk [vmem:[%s279 + $0x40] sm:$0xff] %vm1425, %v1780
        %1883 = vst.msk [vmem:[%s279 + $0x48] sm:$0xff] %vm1425, %v1783
        %1884 = vst.msk [vmem:[%s279 + $0x50] sm:$0xff] %vm1425, %v1788
        %1885 = vst.msk [vmem:[%s279 + $0x58] sm:$0xff] %vm1425, %v1791
        %1886 = vst.msk [vmem:[%s279 + $0x60] sm:$0xff] %vm1425, %v1796
        %1887 = vst.msk [vmem:[%s279 + $0x68] sm:$0xff] %vm1425, %v1799
        %1888 = vst.msk [vmem:[%s279 + $0x70] sm:$0xff] %vm1425, %v1804
        %1889 = vst.msk [vmem:[%s279 + $0x78] sm:$0xff] %vm1425, %v1807
        %1890 = vst.msk [vmem:[%s279 + $0x80] sm:$0xff] %vm1425, %v1812
        %1891 = vst.msk [vmem:[%s279 + $0x88] sm:$0xff] %vm1425, %v1815
        %1892 = vst.msk [vmem:[%s279 + $0x90] sm:$0xff] %vm1425, %v1820
        %1893 = vst.msk [vmem:[%s279 + $0x98] sm:$0xff] %vm1425, %v1823
        %1894 = vst.msk [vmem:[%s279 + $0xa0] sm:$0xff] %vm1425, %v1828
        %1895 = vst.msk [vmem:[%s279 + $0xa8] sm:$0xff] %vm1425, %v1831
        %1896 = vst.msk [vmem:[%s279 + $0xb0] sm:$0xff] %vm1425, %v1836
        %1897 = vst.msk [vmem:[%s279 + $0xb8] sm:$0xff] %vm1425, %v1839
        %1898 = vst.msk [vmem:[%s279 + $0xc0] sm:$0xff] %vm1425, %v1844
        %1899 = vst.msk [vmem:[%s279 + $0xc8] sm:$0xff] %vm1425, %v1847
        %1900 = vst.msk [vmem:[%s279 + $0xd0] sm:$0xff] %vm1425, %v1852
        %1901 = vst.msk [vmem:[%s279 + $0xd8] sm:$0xff] %vm1425, %v1855
        %1902 = vst.msk [vmem:[%s279 + $0xe0] sm:$0xff] %vm1425, %v1860
        %1903 = vst.msk [vmem:[%s279 + $0xe8] sm:$0xff] %vm1425, %v1863
        %1904 = vst.msk [vmem:[%s279 + $0xf0] sm:$0xff] %vm1425, %v1868
        %1905 = vst.msk [vmem:[%s279 + $0xf8] sm:$0xff] %vm1425, %v1871
        %v1906 = vsel %vm1425, %v1748, 0.0
        %v1907 = vsel %vm1425, %v1751, 0.0
        %v1908 = vadd.f32 %v1906, %v1907
        %v1909 = vsel %vm1425, %v1756, 0.0
        %v1910 = vadd.f32 %v1908, %v1909
        %v1911 = vsel %vm1425, %v1759, 0.0
        %v1912 = vadd.f32 %v1910, %v1911
        %v1913 = vsel %vm1425, %v1764, 0.0
        %v1914 = vadd.f32 %v1912, %v1913
        %v1915 = vsel %vm1425, %v1767, 0.0
        %v1916 = vadd.f32 %v1914, %v1915
        %v1917 = vsel %vm1425, %v1772, 0.0
        %v1918 = vadd.f32 %v1916, %v1917
        %v1919 = vsel %vm1425, %v1775, 0.0
        %v1920 = vadd.f32 %v1918, %v1919
        %v1921 = vsel %vm1425, %v1780, 0.0
        %v1922 = vadd.f32 %v1920, %v1921
        %v1923 = vsel %vm1425, %v1783, 0.0
        %v1924 = vadd.f32 %v1922, %v1923
        %v1925 = vsel %vm1425, %v1788, 0.0
        %v1926 = vadd.f32 %v1924, %v1925
        %v1927 = vsel %vm1425, %v1791, 0.0
        %v1928 = vadd.f32 %v1926, %v1927
        %v1929 = vsel %vm1425, %v1796, 0.0
        %v1930 = vadd.f32 %v1928, %v1929
        %v1931 = vsel %vm1425, %v1799, 0.0
        %v1932 = vadd.f32 %v1930, %v1931
        %v1933 = vsel %vm1425, %v1804, 0.0
        %v1934 = vadd.f32 %v1932, %v1933
        %v1935 = vsel %vm1425, %v1807, 0.0
        %v1936 = vadd.f32 %v1934, %v1935
        %v1937 = vsel %vm1425, %v1812, 0.0
        %v1938 = vadd.f32 %v1936, %v1937
        %v1939 = vsel %vm1425, %v1815, 0.0
        %v1940 = vadd.f32 %v1938, %v1939
        %v1941 = vsel %vm1425, %v1820, 0.0
        %v1942 = vadd.f32 %v1940, %v1941
        %v1943 = vsel %vm1425, %v1823, 0.0
        %v1944 = vadd.f32 %v1942, %v1943
        %v1945 = vsel %vm1425, %v1828, 0.0
        %v1946 = vadd.f32 %v1944, %v1945
        %v1947 = vsel %vm1425, %v1831, 0.0
        %v1948 = vadd.f32 %v1946, %v1947
        %v1949 = vsel %vm1425, %v1836, 0.0
        %v1950 = vadd.f32 %v1948, %v1949
        %v1951 = vsel %vm1425, %v1839, 0.0
        %v1952 = vadd.f32 %v1950, %v1951
        %v1953 = vsel %vm1425, %v1844, 0.0
        %v1954 = vadd.f32 %v1952, %v1953
        %v1955 = vsel %vm1425, %v1847, 0.0
        %v1956 = vadd.f32 %v1954, %v1955
        %v1957 = vsel %vm1425, %v1852, 0.0
        %v1958 = vadd.f32 %v1956, %v1957
        %v1959 = vsel %vm1425, %v1855, 0.0
        %v1960 = vadd.f32 %v1958, %v1959
        %v1961 = vsel %vm1425, %v1860, 0.0
        %v1962 = vadd.f32 %v1960, %v1961
        %v1963 = vsel %vm1425, %v1863, 0.0
        %v1964 = vadd.f32 %v1962, %v1963
        %v1965 = vsel %vm1425, %v1868, 0.0
        %v1966 = vadd.f32 %v1964, %v1965
        %v1967 = vsel %vm1425, %v1871, 0.0
        %v1968 = vadd.f32 %v1966, %v1967
        %v1969 = vrot.slane %v1968, 4
        %v1970 = vadd.f32 %v1968, %v1969
        %v1971 = vrot.slane %v1970, 2
        %v1972 = vadd.f32 %v1970, %v1971
        %v1973 = vrot.slane %v1972, 1
        %v1974 = vadd.f32 %v1972, %v1973
        %v1975 = vmul.f32 %v1748, %v1748
        %v1976 = vmul.f32 %v1751, %v1751
        %v1977 = vmul.f32 %v1756, %v1756
        %v1978 = vmul.f32 %v1759, %v1759
        %v1979 = vmul.f32 %v1764, %v1764
        %v1980 = vmul.f32 %v1767, %v1767
        %v1981 = vmul.f32 %v1772, %v1772
        %v1982 = vmul.f32 %v1775, %v1775
        %v1983 = vmul.f32 %v1780, %v1780
        %v1984 = vmul.f32 %v1783, %v1783
        %v1985 = vmul.f32 %v1788, %v1788
        %v1986 = vmul.f32 %v1791, %v1791
        %v1987 = vmul.f32 %v1796, %v1796
        %v1988 = vmul.f32 %v1799, %v1799
        %v1989 = vmul.f32 %v1804, %v1804
        %v1990 = vmul.f32 %v1807, %v1807
        %v1991 = vmul.f32 %v1812, %v1812
        %v1992 = vmul.f32 %v1815, %v1815
        %v1993 = vmul.f32 %v1820, %v1820
        %v1994 = vmul.f32 %v1823, %v1823
        %v1995 = vmul.f32 %v1828, %v1828
        %v1996 = vmul.f32 %v1831, %v1831
        %v1997 = vmul.f32 %v1836, %v1836
        %v1998 = vmul.f32 %v1839, %v1839
        %v1999 = vmul.f32 %v1844, %v1844
        %v2000 = vmul.f32 %v1847, %v1847
        %v2001 = vmul.f32 %v1852, %v1852
        %v2002 = vmul.f32 %v1855, %v1855
        %v2003 = vmul.f32 %v1860, %v1860
        %v2004 = vmul.f32 %v1863, %v1863
        %v2005 = vmul.f32 %v1868, %v1868
        %v2006 = vmul.f32 %v1871, %v1871
        %v2007 = vsel %vm1425, %v1975, 0.0
        %v2008 = vsel %vm1425, %v1976, 0.0
        %v2009 = vadd.f32 %v2007, %v2008
        %v2010 = vsel %vm1425, %v1977, 0.0
        %v2011 = vadd.f32 %v2009, %v2010
        %v2012 = vsel %vm1425, %v1978, 0.0
        %v2013 = vadd.f32 %v2011, %v2012
        %v2014 = vsel %vm1425, %v1979, 0.0
        %v2015 = vadd.f32 %v2013, %v2014
        %v2016 = vsel %vm1425, %v1980, 0.0
        %v2017 = vadd.f32 %v2015, %v2016
        %v2018 = vsel %vm1425, %v1981, 0.0
        %v2019 = vadd.f32 %v2017, %v2018
        %v2020 = vsel %vm1425, %v1982, 0.0
        %v2021 = vadd.f32 %v2019, %v2020
        %v2022 = vsel %vm1425, %v1983, 0.0
        %v2023 = vadd.f32 %v2021, %v2022
        %v2024 = vsel %vm1425, %v1984, 0.0
        %v2025 = vadd.f32 %v2023, %v2024
        %v2026 = vsel %vm1425, %v1985, 0.0
        %v2027 = vadd.f32 %v2025, %v2026
        %v2028 = vsel %vm1425, %v1986, 0.0
        %v2029 = vadd.f32 %v2027, %v2028
        %v2030 = vsel %vm1425, %v1987, 0.0
        %v2031 = vadd.f32 %v2029, %v2030
        %v2032 = vsel %vm1425, %v1988, 0.0
        %v2033 = vadd.f32 %v2031, %v2032
        %v2034 = vsel %vm1425, %v1989, 0.0
        %v2035 = vadd.f32 %v2033, %v2034
        %v2036 = vsel %vm1425, %v1990, 0.0
        %v2037 = vadd.f32 %v2035, %v2036
        %v2038 = vsel %vm1425, %v1991, 0.0
        %v2039 = vadd.f32 %v2037, %v2038
        %v2040 = vsel %vm1425, %v1992, 0.0
        %v2041 = vadd.f32 %v2039, %v2040
        %v2042 = vsel %vm1425, %v1993, 0.0
        %v2043 = vadd.f32 %v2041, %v2042
        %v2044 = vsel %vm1425, %v1994, 0.0
        %v2045 = vadd.f32 %v2043, %v2044
        %v2046 = vsel %vm1425, %v1995, 0.0
        %v2047 = vadd.f32 %v2045, %v2046
        %v2048 = vsel %vm1425, %v1996, 0.0
        %v2049 = vadd.f32 %v2047, %v2048
        %v2050 = vsel %vm1425, %v1997, 0.0
        %v2051 = vadd.f32 %v2049, %v2050
        %v2052 = vsel %vm1425, %v1998, 0.0
        %v2053 = vadd.f32 %v2051, %v2052
        %v2054 = vsel %vm1425, %v1999, 0.0
        %v2055 = vadd.f32 %v2053, %v2054
        %v2056 = vsel %vm1425, %v2000, 0.0
        %v2057 = vadd.f32 %v2055, %v2056
        %v2058 = vsel %vm1425, %v2001, 0.0
        %v2059 = vadd.f32 %v2057, %v2058
        %v2060 = vsel %vm1425, %v2002, 0.0
        %v2061 = vadd.f32 %v2059, %v2060
        %v2062 = vsel %vm1425, %v2003, 0.0
        %v2063 = vadd.f32 %v2061, %v2062
        %v2064 = vsel %vm1425, %v2004, 0.0
        %v2065 = vadd.f32 %v2063, %v2064
        %v2066 = vsel %vm1425, %v2005, 0.0
        %v2067 = vadd.f32 %v2065, %v2066
        %v2068 = vsel %vm1425, %v2006, 0.0
        %v2069 = vadd.f32 %v2067, %v2068
        %v2070 = vrot.slane %v2069, 4
        %v2071 = vadd.f32 %v2069, %v2070
        %v2072 = vrot.slane %v2071, 2
        %v2073 = vadd.f32 %v2071, %v2072
        %v2074 = vrot.slane %v2073, 1
        %v2075 = vadd.f32 %v2073, %v2074
        %vm2076 = vcmask 1040384
        %v2077 = vsel %vm2076, %v1974, %v2075
        %vm2078 = vcmask 58368
        %2079 = vst.msk [vmem:[%s262] sm:$0x3] %vm2078, %v2077
        %v2080 = vld [vmem:[%s2] sm:$0x3]
        %v2082 = vsel %vm1376, %v1039, 0
        %v2085 = vsel %vm1376, %v1040, 0
        %v2088 = vsel %vm1376, %v1041, 0
        %v2091 = vsel %vm1376, %v1042, 0
        %v2094 = vsel %vm1376, %v1043, 0
        %v2097 = vsel %vm1376, %v1044, 0
        %v2100 = vsel %vm1376, %v1045, 0
        %v2103 = vsel %vm1376, %v1046, 0
        %v2106 = vsel %vm1376, %v1047, 0
        %v2109 = vsel %vm1376, %v1048, 0
        %v2112 = vsel %vm1376, %v1049, 0
        %v2115 = vsel %vm1376, %v1050, 0
        %v2118 = vsel %vm1376, %v1051, 0
        %v2121 = vsel %vm1376, %v1052, 0
        %v2124 = vsel %vm1376, %v1053, 0
        %v2127 = vsel %vm1376, %v1203, 0
        %v2130 = vsel %vm1709, %v2080, 0
        %2132 = vmatprep.subr.bf16.mxu0 0
        %2133 = vmatpush1.bf16.msra.mxu0 %v2130
        %2134 = vmatprep.subr.bf16.mxu0 0
        %2135 = vmatpush1.bf16.msra.mxu0 0
        %2136 = vmatprep.subr.bf16.mxu0 0
        %2137 = vmatpush1.bf16.msra.mxu0 0
        %2138 = vmatprep.subr.bf16.mxu0 0
        %2139 = vmatpush1.bf16.msra.mxu0 0
        %2140 = vmatprep.subr.bf16.mxu0 0
        %2141 = vmatpush1.bf16.msra.mxu0 0
        %2142 = vmatprep.subr.bf16.mxu0 0
        %2143 = vmatpush1.bf16.msra.mxu0 0
        %2144 = vmatprep.subr.bf16.mxu0 0
        %2145 = vmatpush1.bf16.msra.mxu0 0
        %2146 = vmatprep.subr.bf16.mxu0 0
        %2147 = vmatpush1.bf16.msra.mxu0 0
        %2148 = vmatprep.subr.bf16.mxu0 0
        %2149 = vmatpush1.bf16.msra.mxu0 0
        %2150 = vmatprep.subr.bf16.mxu0 0
        %2151 = vmatpush1.bf16.msra.mxu0 0
        %2152 = vmatprep.subr.bf16.mxu0 0
        %2153 = vmatpush1.bf16.msra.mxu0 0
        %2154 = vmatprep.subr.bf16.mxu0 0
        %2155 = vmatpush1.bf16.msra.mxu0 0
        %2156 = vmatprep.subr.bf16.mxu0 0
        %2157 = vmatpush1.bf16.msra.mxu0 0
        %2158 = vmatprep.subr.bf16.mxu0 0
        %2159 = vmatpush1.bf16.msra.mxu0 0
        %2160 = vmatprep.subr.bf16.mxu0 0
        %2161 = vmatpush1.bf16.msra.mxu0 0
        %2162 = vmatprep.subr.bf16.mxu0 0
        %2163 = vmatpush1.bf16.msra.mxu0 0
        %2164 = vmatprep.mubr.bf16.mxu0 0
        %2165 = vmatmul.mubr.bf16.gmra.mrb[0].mxu0 %v2082
        %v2166 = vpop.f32.mrb[0].mxu0
        %v2167 = vadd.f32 0.0, %v2166
        %v2168 = vpop.f32.mrb[0].mxu0
        %v2169 = vpop.f32.mrb[0].mxu0
        %v2170 = vadd.f32 0.0, %v2169
        %v2171 = vpop.f32.mrb[0].mxu0
        %2172 = vmatprep.mubr.bf16.mxu0 0
        %2173 = vmatmul.mubr.bf16.gmra.mrb[0].mxu0 %v2085
        %v2174 = vpop.f32.mrb[0].mxu0
        %v2175 = vadd.f32 0.0, %v2174
        %v2176 = vpop.f32.mrb[0].mxu0
        %v2177 = vpop.f32.mrb[0].mxu0
        %v2178 = vadd.f32 0.0, %v2177
        %v2179 = vpop.f32.mrb[0].mxu0
        %2180 = vmatprep.mubr.bf16.mxu0 0
        %2181 = vmatmul.mubr.bf16.gmra.mrb[0].mxu0 %v2088
        %v2182 = vpop.f32.mrb[0].mxu0
        %v2183 = vadd.f32 0.0, %v2182
        %v2184 = vpop.f32.mrb[0].mxu0
        %v2185 = vpop.f32.mrb[0].mxu0
        %v2186 = vadd.f32 0.0, %v2185
        %v2187 = vpop.f32.mrb[0].mxu0
        %2188 = vmatprep.mubr.bf16.mxu0 0
        %2189 = vmatmul.mubr.bf16.gmra.mrb[0].mxu0 %v2091
        %v2190 = vpop.f32.mrb[0].mxu0
        %v2191 = vadd.f32 0.0, %v2190
        %v2192 = vpop.f32.mrb[0].mxu0
        %v2193 = vpop.f32.mrb[0].mxu0
        %v2194 = vadd.f32 0.0, %v2193
        %v2195 = vpop.f32.mrb[0].mxu0
        %2196 = vmatprep.mubr.bf16.mxu0 0
        %2197 = vmatmul.mubr.bf16.gmra.mrb[0].mxu0 %v2094
        %v2198 = vpop.f32.mrb[0].mxu0
        %v2199 = vadd.f32 0.0, %v2198
        %v2200 = vpop.f32.mrb[0].mxu0
        %v2201 = vpop.f32.mrb[0].mxu0
        %v2202 = vadd.f32 0.0, %v2201
        %v2203 = vpop.f32.mrb[0].mxu0
        %2204 = vmatprep.mubr.bf16.mxu0 0
        %2205 = vmatmul.mubr.bf16.gmra.mrb[0].mxu0 %v2097
        %v2206 = vpop.f32.mrb[0].mxu0
        %v2207 = vadd.f32 0.0, %v2206
        %v2208 = vpop.f32.mrb[0].mxu0
        %v2209 = vpop.f32.mrb[0].mxu0
        %v2210 = vadd.f32 0.0, %v2209
        %v2211 = vpop.f32.mrb[0].mxu0
        %2212 = vmatprep.mubr.bf16.mxu0 0
        %2213 = vmatmul.mubr.bf16.gmra.mrb[0].mxu0 %v2100
        %v2214 = vpop.f32.mrb[0].mxu0
        %v2215 = vadd.f32 0.0, %v2214
        %v2216 = vpop.f32.mrb[0].mxu0
        %v2217 = vpop.f32.mrb[0].mxu0
        %v2218 = vadd.f32 0.0, %v2217
        %v2219 = vpop.f32.mrb[0].mxu0
        %2220 = vmatprep.mubr.bf16.mxu0 0
        %2221 = vmatmul.mubr.bf16.gmra.mrb[0].mxu0 %v2103
        %v2222 = vpop.f32.mrb[0].mxu0
        %v2223 = vadd.f32 0.0, %v2222
        %v2224 = vpop.f32.mrb[0].mxu0
        %v2225 = vpop.f32.mrb[0].mxu0
        %v2226 = vadd.f32 0.0, %v2225
        %v2227 = vpop.f32.mrb[0].mxu0
        %2228 = vmatprep.mubr.bf16.mxu0 0
        %2229 = vmatmul.mubr.bf16.gmra.mrb[0].mxu0 %v2106
        %v2230 = vpop.f32.mrb[0].mxu0
        %v2231 = vadd.f32 0.0, %v2230
        %v2232 = vpop.f32.mrb[0].mxu0
        %v2233 = vpop.f32.mrb[0].mxu0
        %v2234 = vadd.f32 0.0, %v2233
        %v2235 = vpop.f32.mrb[0].mxu0
        %2236 = vmatprep.mubr.bf16.mxu0 0
        %2237 = vmatmul.mubr.bf16.gmra.mrb[0].mxu0 %v2109
        %v2238 = vpop.f32.mrb[0].mxu0
        %v2239 = vadd.f32 0.0, %v2238
        %v2240 = vpop.f32.mrb[0].mxu0
        %v2241 = vpop.f32.mrb[0].mxu0
        %v2242 = vadd.f32 0.0, %v2241
        %v2243 = vpop.f32.mrb[0].mxu0
        %2244 = vmatprep.mubr.bf16.mxu0 0
        %2245 = vmatmul.mubr.bf16.gmra.mrb[0].mxu0 %v2112
        %v2246 = vpop.f32.mrb[0].mxu0
        %v2247 = vadd.f32 0.0, %v2246
        %v2248 = vpop.f32.mrb[0].mxu0
        %v2249 = vpop.f32.mrb[0].mxu0
        %v2250 = vadd.f32 0.0, %v2249
        %v2251 = vpop.f32.mrb[0].mxu0
        %2252 = vmatprep.mubr.bf16.mxu0 0
        %2253 = vmatmul.mubr.bf16.gmra.mrb[0].mxu0 %v2115
        %v2254 = vpop.f32.mrb[0].mxu0
        %v2255 = vadd.f32 0.0, %v2254
        %v2256 = vpop.f32.mrb[0].mxu0
        %v2257 = vpop.f32.mrb[0].mxu0
        %v2258 = vadd.f32 0.0, %v2257
        %v2259 = vpop.f32.mrb[0].mxu0
        %2260 = vmatprep.mubr.bf16.mxu0 0
        %2261 = vmatmul.mubr.bf16.gmra.mrb[0].mxu0 %v2118
        %v2262 = vpop.f32.mrb[0].mxu0
        %v2263 = vadd.f32 0.0, %v2262
        %v2264 = vpop.f32.mrb[0].mxu0
        %v2265 = vpop.f32.mrb[0].mxu0
        %v2266 = vadd.f32 0.0, %v2265
        %v2267 = vpop.f32.mrb[0].mxu0
        %2268 = vmatprep.mubr.bf16.mxu0 0
        %2269 = vmatmul.mubr.bf16.gmra.mrb[0].mxu0 %v2121
        %v2270 = vpop.f32.mrb[0].mxu0
        %v2271 = vadd.f32 0.0, %v2270
        %v2272 = vpop.f32.mrb[0].mxu0
        %v2273 = vpop.f32.mrb[0].mxu0
        %v2274 = vadd.f32 0.0, %v2273
        %v2275 = vpop.f32.mrb[0].mxu0
        %2276 = vmatprep.mubr.bf16.mxu0 0
        %2277 = vmatmul.mubr.bf16.gmra.mrb[0].mxu0 %v2124
        %v2278 = vpop.f32.mrb[0].mxu0
        %v2279 = vadd.f32 0.0, %v2278
        %v2280 = vpop.f32.mrb[0].mxu0
        %v2281 = vpop.f32.mrb[0].mxu0
        %v2282 = vadd.f32 0.0, %v2281
        %v2283 = vpop.f32.mrb[0].mxu0
        %2284 = vmatprep.mubr.bf16.mxu0 0
        %2285 = vmatmul.mubr.bf16.gmra.mrb[0].mxu0 %v2127
        %v2286 = vpop.f32.mrb[0].mxu0
        %v2287 = vadd.f32 0.0, %v2286
        %v2288 = vpop.f32.mrb[0].mxu0
        %v2289 = vpop.f32.mrb[0].mxu0
        %v2290 = vadd.f32 0.0, %v2289
        %v2291 = vpop.f32.mrb[0].mxu0
        %2292 = vdwg.mxu0
        %2293 = vst.msk [vmem:[%s284] sm:$0xff] %vm1425, %v2167
        %2294 = vst.msk [vmem:[%s284 + $0x8] sm:$0xff] %vm1425, %v2170
        %2295 = vst.msk [vmem:[%s284 + $0x10] sm:$0xff] %vm1425, %v2175
        %2296 = vst.msk [vmem:[%s284 + $0x18] sm:$0xff] %vm1425, %v2178
        %2297 = vst.msk [vmem:[%s284 + $0x20] sm:$0xff] %vm1425, %v2183
        %2298 = vst.msk [vmem:[%s284 + $0x28] sm:$0xff] %vm1425, %v2186
        %2299 = vst.msk [vmem:[%s284 + $0x30] sm:$0xff] %vm1425, %v2191
        %2300 = vst.msk [vmem:[%s284 + $0x38] sm:$0xff] %vm1425, %v2194
        %2301 = vst.msk [vmem:[%s284 + $0x40] sm:$0xff] %vm1425, %v2199
        %2302 = vst.msk [vmem:[%s284 + $0x48] sm:$0xff] %vm1425, %v2202
        %2303 = vst.msk [vmem:[%s284 + $0x50] sm:$0xff] %vm1425, %v2207
        %2304 = vst.msk [vmem:[%s284 + $0x58] sm:$0xff] %vm1425, %v2210
        %2305 = vst.msk [vmem:[%s284 + $0x60] sm:$0xff] %vm1425, %v2215
        %2306 = vst.msk [vmem:[%s284 + $0x68] sm:$0xff] %vm1425, %v2218
        %2307 = vst.msk [vmem:[%s284 + $0x70] sm:$0xff] %vm1425, %v2223
        %2308 = vst.msk [vmem:[%s284 + $0x78] sm:$0xff] %vm1425, %v2226
        %2309 = vst.msk [vmem:[%s284 + $0x80] sm:$0xff] %vm1425, %v2231
        %2310 = vst.msk [vmem:[%s284 + $0x88] sm:$0xff] %vm1425, %v2234
        %2311 = vst.msk [vmem:[%s284 + $0x90] sm:$0xff] %vm1425, %v2239
        %2312 = vst.msk [vmem:[%s284 + $0x98] sm:$0xff] %vm1425, %v2242
        %2313 = vst.msk [vmem:[%s284 + $0xa0] sm:$0xff] %vm1425, %v2247
        %2314 = vst.msk [vmem:[%s284 + $0xa8] sm:$0xff] %vm1425, %v2250
        %2315 = vst.msk [vmem:[%s284 + $0xb0] sm:$0xff] %vm1425, %v2255
        %2316 = vst.msk [vmem:[%s284 + $0xb8] sm:$0xff] %vm1425, %v2258
        %2317 = vst.msk [vmem:[%s284 + $0xc0] sm:$0xff] %vm1425, %v2263
        %2318 = vst.msk [vmem:[%s284 + $0xc8] sm:$0xff] %vm1425, %v2266
        %2319 = vst.msk [vmem:[%s284 + $0xd0] sm:$0xff] %vm1425, %v2271
        %2320 = vst.msk [vmem:[%s284 + $0xd8] sm:$0xff] %vm1425, %v2274
        %2321 = vst.msk [vmem:[%s284 + $0xe0] sm:$0xff] %vm1425, %v2279
        %2322 = vst.msk [vmem:[%s284 + $0xe8] sm:$0xff] %vm1425, %v2282
        %2323 = vst.msk [vmem:[%s284 + $0xf0] sm:$0xff] %vm1425, %v2287
        %2324 = vst.msk [vmem:[%s284 + $0xf8] sm:$0xff] %vm1425, %v2290
        %v2325 = vsel %vm1425, %v2167, 0.0
        %v2326 = vsel %vm1425, %v2170, 0.0
        %v2327 = vadd.f32 %v2325, %v2326
        %v2328 = vsel %vm1425, %v2175, 0.0
        %v2329 = vadd.f32 %v2327, %v2328
        %v2330 = vsel %vm1425, %v2178, 0.0
        %v2331 = vadd.f32 %v2329, %v2330
        %v2332 = vsel %vm1425, %v2183, 0.0
        %v2333 = vadd.f32 %v2331, %v2332
        %v2334 = vsel %vm1425, %v2186, 0.0
        %v2335 = vadd.f32 %v2333, %v2334
        %v2336 = vsel %vm1425, %v2191, 0.0
        %v2337 = vadd.f32 %v2335, %v2336
        %v2338 = vsel %vm1425, %v2194, 0.0
        %v2339 = vadd.f32 %v2337, %v2338
        %v2340 = vsel %vm1425, %v2199, 0.0
        %v2341 = vadd.f32 %v2339, %v2340
        %v2342 = vsel %vm1425, %v2202, 0.0
        %v2343 = vadd.f32 %v2341, %v2342
        %v2344 = vsel %vm1425, %v2207, 0.0
        %v2345 = vadd.f32 %v2343, %v2344
        %v2346 = vsel %vm1425, %v2210, 0.0
        %v2347 = vadd.f32 %v2345, %v2346
        %v2348 = vsel %vm1425, %v2215, 0.0
        %v2349 = vadd.f32 %v2347, %v2348
        %v2350 = vsel %vm1425, %v2218, 0.0
        %v2351 = vadd.f32 %v2349, %v2350
        %v2352 = vsel %vm1425, %v2223, 0.0
        %v2353 = vadd.f32 %v2351, %v2352
        %v2354 = vsel %vm1425, %v2226, 0.0
        %v2355 = vadd.f32 %v2353, %v2354
        %v2356 = vsel %vm1425, %v2231, 0.0
        %v2357 = vadd.f32 %v2355, %v2356
        %v2358 = vsel %vm1425, %v2234, 0.0
        %v2359 = vadd.f32 %v2357, %v2358
        %v2360 = vsel %vm1425, %v2239, 0.0
        %v2361 = vadd.f32 %v2359, %v2360
        %v2362 = vsel %vm1425, %v2242, 0.0
        %v2363 = vadd.f32 %v2361, %v2362
        %v2364 = vsel %vm1425, %v2247, 0.0
        %v2365 = vadd.f32 %v2363, %v2364
        %v2366 = vsel %vm1425, %v2250, 0.0
        %v2367 = vadd.f32 %v2365, %v2366
        %v2368 = vsel %vm1425, %v2255, 0.0
        %v2369 = vadd.f32 %v2367, %v2368
        %v2370 = vsel %vm1425, %v2258, 0.0
        %v2371 = vadd.f32 %v2369, %v2370
        %v2372 = vsel %vm1425, %v2263, 0.0
        %v2373 = vadd.f32 %v2371, %v2372
        %v2374 = vsel %vm1425, %v2266, 0.0
        %v2375 = vadd.f32 %v2373, %v2374
        %v2376 = vsel %vm1425, %v2271, 0.0
        %v2377 = vadd.f32 %v2375, %v2376
        %v2378 = vsel %vm1425, %v2274, 0.0
        %v2379 = vadd.f32 %v2377, %v2378
        %v2380 = vsel %vm1425, %v2279, 0.0
        %v2381 = vadd.f32 %v2379, %v2380
        %v2382 = vsel %vm1425, %v2282, 0.0
        %v2383 = vadd.f32 %v2381, %v2382
        %v2384 = vsel %vm1425, %v2287, 0.0
        %v2385 = vadd.f32 %v2383, %v2384
        %v2386 = vsel %vm1425, %v2290, 0.0
        %v2387 = vadd.f32 %v2385, %v2386
        %v2388 = vrot.slane %v2387, 4
        %v2389 = vadd.f32 %v2387, %v2388
        %v2390 = vrot.slane %v2389, 2
        %v2391 = vadd.f32 %v2389, %v2390
        %v2392 = vrot.slane %v2391, 1
        %v2393 = vadd.f32 %v2391, %v2392
        %v2394 = vmul.f32 %v2167, %v2167
        %v2395 = vmul.f32 %v2170, %v2170
        %v2396 = vmul.f32 %v2175, %v2175
        %v2397 = vmul.f32 %v2178, %v2178
        %v2398 = vmul.f32 %v2183, %v2183
        %v2399 = vmul.f32 %v2186, %v2186
        %v2400 = vmul.f32 %v2191, %v2191
        %v2401 = vmul.f32 %v2194, %v2194
        %v2402 = vmul.f32 %v2199, %v2199
        %v2403 = vmul.f32 %v2202, %v2202
        %v2404 = vmul.f32 %v2207, %v2207
        %v2405 = vmul.f32 %v2210, %v2210
        %v2406 = vmul.f32 %v2215, %v2215
        %v2407 = vmul.f32 %v2218, %v2218
        %v2408 = vmul.f32 %v2223, %v2223
        %v2409 = vmul.f32 %v2226, %v2226
        %v2410 = vmul.f32 %v2231, %v2231
        %v2411 = vmul.f32 %v2234, %v2234
        %v2412 = vmul.f32 %v2239, %v2239
        %v2413 = vmul.f32 %v2242, %v2242
        %v2414 = vmul.f32 %v2247, %v2247
        %v2415 = vmul.f32 %v2250, %v2250
        %v2416 = vmul.f32 %v2255, %v2255
        %v2417 = vmul.f32 %v2258, %v2258
        %v2418 = vmul.f32 %v2263, %v2263
        %v2419 = vmul.f32 %v2266, %v2266
        %v2420 = vmul.f32 %v2271, %v2271
        %v2421 = vmul.f32 %v2274, %v2274
        %v2422 = vmul.f32 %v2279, %v2279
        %v2423 = vmul.f32 %v2282, %v2282
        %v2424 = vmul.f32 %v2287, %v2287
        %v2425 = vmul.f32 %v2290, %v2290
        %v2426 = vsel %vm1425, %v2394, 0.0
        %v2427 = vsel %vm1425, %v2395, 0.0
        %v2428 = vadd.f32 %v2426, %v2427
        %v2429 = vsel %vm1425, %v2396, 0.0
        %v2430 = vadd.f32 %v2428, %v2429
        %v2431 = vsel %vm1425, %v2397, 0.0
        %v2432 = vadd.f32 %v2430, %v2431
        %v2433 = vsel %vm1425, %v2398, 0.0
        %v2434 = vadd.f32 %v2432, %v2433
        %v2435 = vsel %vm1425, %v2399, 0.0
        %v2436 = vadd.f32 %v2434, %v2435
        %v2437 = vsel %vm1425, %v2400, 0.0
        %v2438 = vadd.f32 %v2436, %v2437
        %v2439 = vsel %vm1425, %v2401, 0.0
        %v2440 = vadd.f32 %v2438, %v2439
        %v2441 = vsel %vm1425, %v2402, 0.0
        %v2442 = vadd.f32 %v2440, %v2441
        %v2443 = vsel %vm1425, %v2403, 0.0
        %v2444 = vadd.f32 %v2442, %v2443
        %v2445 = vsel %vm1425, %v2404, 0.0
        %v2446 = vadd.f32 %v2444, %v2445
        %v2447 = vsel %vm1425, %v2405, 0.0
        %v2448 = vadd.f32 %v2446, %v2447
        %v2449 = vsel %vm1425, %v2406, 0.0
        %v2450 = vadd.f32 %v2448, %v2449
        %v2451 = vsel %vm1425, %v2407, 0.0
        %v2452 = vadd.f32 %v2450, %v2451
        %v2453 = vsel %vm1425, %v2408, 0.0
        %v2454 = vadd.f32 %v2452, %v2453
        %v2455 = vsel %vm1425, %v2409, 0.0
        %v2456 = vadd.f32 %v2454, %v2455
        %v2457 = vsel %vm1425, %v2410, 0.0
        %v2458 = vadd.f32 %v2456, %v2457
        %v2459 = vsel %vm1425, %v2411, 0.0
        %v2460 = vadd.f32 %v2458, %v2459
        %v2461 = vsel %vm1425, %v2412, 0.0
        %v2462 = vadd.f32 %v2460, %v2461
        %v2463 = vsel %vm1425, %v2413, 0.0
        %v2464 = vadd.f32 %v2462, %v2463
        %v2465 = vsel %vm1425, %v2414, 0.0
        %v2466 = vadd.f32 %v2464, %v2465
        %v2467 = vsel %vm1425, %v2415, 0.0
        %v2468 = vadd.f32 %v2466, %v2467
        %v2469 = vsel %vm1425, %v2416, 0.0
        %v2470 = vadd.f32 %v2468, %v2469
        %v2471 = vsel %vm1425, %v2417, 0.0
        %v2472 = vadd.f32 %v2470, %v2471
        %v2473 = vsel %vm1425, %v2418, 0.0
        %v2474 = vadd.f32 %v2472, %v2473
        %v2475 = vsel %vm1425, %v2419, 0.0
        %v2476 = vadd.f32 %v2474, %v2475
        %v2477 = vsel %vm1425, %v2420, 0.0
        %v2478 = vadd.f32 %v2476, %v2477
        %v2479 = vsel %vm1425, %v2421, 0.0
        %v2480 = vadd.f32 %v2478, %v2479
        %v2481 = vsel %vm1425, %v2422, 0.0
        %v2482 = vadd.f32 %v2480, %v2481
        %v2483 = vsel %vm1425, %v2423, 0.0
        %v2484 = vadd.f32 %v2482, %v2483
        %v2485 = vsel %vm1425, %v2424, 0.0
        %v2486 = vadd.f32 %v2484, %v2485
        %v2487 = vsel %vm1425, %v2425, 0.0
        %v2488 = vadd.f32 %v2486, %v2487
        %v2489 = vrot.slane %v2488, 4
        %v2490 = vadd.f32 %v2488, %v2489
        %v2491 = vrot.slane %v2490, 2
        %v2492 = vadd.f32 %v2490, %v2491
        %v2493 = vrot.slane %v2492, 1
        %v2494 = vadd.f32 %v2492, %v2493
        %v2495 = vsel %vm2076, %v2393, %v2494
        %2496 = vst.msk [vmem:[%s269] sm:$0x3] %vm2078, %v2495
        %p2497 = scmp.lt.s32.totalorder %s24, 1
        %s2498 = scalar_select %p2497, %s24, 1
        %s2499 = smul.addr %s2498, 32
        %s2500 = smul.addr %s2499, 8
        %s2501 = scalar_lea.vmem %s3, %s2500
        %p2502 = scmp.lt.s32.totalorder %s24, 1
        %s2503 = scalar_select %p2502, %s24, 1
        %s2504 = smul.addr %s2503, 32
        %s2505 = smul.addr %s2504, 8
        %s2506 = scalar_lea.vmem %s4, %s2505
        %s2507 = sand.u32 %s152, 1
        %s2508 = scalar_lea.sflag [#allocation3], %s2507
        %s2509 = sand.u32 %s152, 1
        %s2510 = smul.addr %s2509, 2
        %s2511 = scalar_lea.vmem [#allocation2], %s2510
        %s2512 = sand.u32 %s178, 1
        %s2513 = scalar_lea.sflag [#allocation5], %s2512
        %s2514 = sand.u32 %s178, 1
        %s2515 = smul.addr %s2514, 2
        %s2516 = scalar_lea.vmem [#allocation4], %s2515
        // Predicated region
        $region33: #{tpu_custom_call.1} parent=31 // pred_check
          %p2517 = pneg %p110
        $region34: #{tpu_custom_call.1} parent=31 // pred_check_branch
          %2519 = sbr.rel (%p2517) target = $region36
        $region35: #{tpu_custom_call.1} parent=31 // pred_region
          _
        $region36: #{tpu_custom_call.1} parent=31 // pred_fallthru
          _
        // Predicated region
        $region37: #{tpu_custom_call.1} parent=31 // pred_check
          %p2520 = pneg %p136
        $region38: #{tpu_custom_call.1} parent=31 // pred_check_branch
          %2522 = sbr.rel (%p2520) target = $region40
        $region39: #{tpu_custom_call.1} parent=31 // pred_region
          _
        $region40: #{tpu_custom_call.1} parent=31 // pred_fallthru
          _
        // Predicated region
        $region41: #{tpu_custom_call.1} parent=31 // pred_check
          %p2523 = pneg %p162
        $region42: #{tpu_custom_call.1} parent=31 // pred_check_branch
          %2525 = sbr.rel (%p2523) target = $region44
        $region43: #{tpu_custom_call.1} parent=31 // pred_region
          %s2527 = ssub.s32 32, 32
          %2528 = vsyncadd %s2508, %s2527
          %s2529 = smul.addr %s24, 32
          %s2530 = scalar_lea.hbm %s5, %s2529
          %s2532 = sshll.u32 %s2511, 4
          %s2533 = int_to_ptr.vmem [resolvable:$true] %s2532
          %2535 = dma.vmem_to_hbm [thread:$0]  %s2533, 32, %s2530, %s2508
        $region44: #{tpu_custom_call.1} parent=31 // pred_fallthru
          _
        // Predicated region
        $region45: #{tpu_custom_call.1} parent=31 // pred_check
          %p2536 = pneg %p188
        $region46: #{tpu_custom_call.1} parent=31 // pred_check_branch
          %2538 = sbr.rel (%p2536) target = $region48
        $region47: #{tpu_custom_call.1} parent=31 // pred_region
          %s2540 = ssub.s32 32, 32
          %2541 = vsyncadd %s2513, %s2540
          %s2542 = smul.addr %s24, 32
          %s2543 = scalar_lea.hbm %s6, %s2542
          %s2545 = sshll.u32 %s2516, 4
          %s2546 = int_to_ptr.vmem [resolvable:$true] %s2545
          %2548 = dma.vmem_to_hbm [thread:$0]  %s2546, 32, %s2543, %s2513
        $region48: #{tpu_custom_call.1} parent=31 // pred_fallthru
          _
      $region32: #{tpu_custom_call.1} parent=5 // pred_fallthru
        _
      %p2549 = scmp.le.s32.totalorder 2, %s19
      // Predicated region
      $region49: #{tpu_custom_call.1} parent=5 // pred_check
        %p2550 = pneg %p2549
      $region50: #{tpu_custom_call.1} parent=5 // pred_check_branch
        %2552 = sbr.rel (%p2550) target = $region52
      $region51: #{tpu_custom_call.1} parent=5 // pred_region
        %s2553 = ssub.s32 %s19, 2
        // Predicated region
        $region53: #{tpu_custom_call.1} parent=51 // pred_check
          %p2554 = pneg %p116
        $region54: #{tpu_custom_call.1} parent=51 // pred_check_branch
          %2556 = sbr.rel (%p2554) target = $region56
        $region55: #{tpu_custom_call.1} parent=51 // pred_region
          %p2557 = scmp.lt.s32.totalorder %s25, 1
          %s2558 = scalar_select %p2557, %s25, 1
          %s2559 = smul.addr %s2558, 32
          %s2560 = smul.addr %s2559, 8
          %s2561 = scalar_lea.vmem %s3, %s2560
        $region56: #{tpu_custom_call.1} parent=51 // pred_fallthru
          _
        // Predicated region
        $region57: #{tpu_custom_call.1} parent=51 // pred_check
          %p2562 = pneg %p142
        $region58: #{tpu_custom_call.1} parent=51 // pred_check_branch
          %2564 = sbr.rel (%p2562) target = $region60
        $region59: #{tpu_custom_call.1} parent=51 // pred_region
          %p2565 = scmp.lt.s32.totalorder %s25, 1
          %s2566 = scalar_select %p2565, %s25, 1
          %s2567 = smul.addr %s2566, 32
          %s2568 = smul.addr %s2567, 8
          %s2569 = scalar_lea.vmem %s4, %s2568
        $region60: #{tpu_custom_call.1} parent=51 // pred_fallthru
          _
        // Predicated region
        $region61: #{tpu_custom_call.1} parent=51 // pred_check
          %p2570 = pneg %p168
        $region62: #{tpu_custom_call.1} parent=51 // pred_check_branch
          %2572 = sbr.rel (%p2570) target = $region64
        $region63: #{tpu_custom_call.1} parent=51 // pred_region
          %s2573 = sand.u32 %s153, 1
          %s2574 = scalar_lea.sflag [#allocation3], %s2573
          %s2575 = sand.u32 %s153, 1
          %s2576 = smul.addr %s2575, 2
          %s2577 = scalar_lea.vmem [#allocation2], %s2576
          %2578 = dma.done %s2574, 32
        $region64: #{tpu_custom_call.1} parent=51 // pred_fallthru
          _
        // Predicated region
        $region65: #{tpu_custom_call.1} parent=51 // pred_check
          %p2579 = pneg %p194
        $region66: #{tpu_custom_call.1} parent=51 // pred_check_branch
          %2581 = sbr.rel (%p2579) target = $region68
        $region67: #{tpu_custom_call.1} parent=51 // pred_region
          %s2582 = sand.u32 %s179, 1
          %s2583 = scalar_lea.sflag [#allocation5], %s2582
          %s2584 = sand.u32 %s179, 1
          %s2585 = smul.addr %s2584, 2
          %s2586 = scalar_lea.vmem [#allocation4], %s2585
          %2587 = dma.done %s2583, 32
        $region68: #{tpu_custom_call.1} parent=51 // pred_fallthru
          _
      $region52: #{tpu_custom_call.1} parent=5 // pred_fallthru
        _
    $region6: #{tpu_custom_call.1} parent=1 // loop_footer
      %s23 = sadd.s32 1, %s19
    $region7: #{tpu_custom_call.1} parent=1 // loop_footer_branch
      %18 = sbr.rel target = $region3
    $region8: #{tpu_custom_call.1} parent=1 // loop_exit
      _
    %2588 = vsyncpa [#allocation3], 1
    %s2589 = scalar_lea.sflag [#allocation3], 1
    %2590 = vsyncpa %s2589, 1
    %2591 = vsyncpa [#allocation5], 1
    %s2592 = scalar_lea.sflag [#allocation5], 1
    %2593 = vsyncpa %s2592, 1

</llo_original>
